<compile_context>
chip_gen: v5e
topology: v5e:2x2
jax: 0.10.0
libtpu: 0.0.40
codegen_flags: <defaults>
</compile_context>

<pallas_src>
import functools

import numpy as np
import jax
import jax.numpy as jnp
from jax.experimental import pallas as pl
from jax.experimental.pallas import tpu as pltpu  # noqa: F401  (kept for TPU-specific tuning hooks)


# ----------------------------------------------------------------------------
# Pallas kernel 1: fused gi-projection completion + dual interleaved GRU
# ----------------------------------------------------------------------------
def _fused_dual_gru_kernel(gi_loc_ref, gi_tim_ref, geo_ref, tau_ref,
                           geo_w_ref, w_tau_ref,
                           whh_sp_ref, whh_tp_ref, bhh_sp_ref, bhh_tp_ref,
                           out_ref, *, seq_len, batch):
    # gi_loc_ref / gi_tim_ref : [S*B, 3H]  (row = t*B + b; biases already folded)
    # geo_ref                 : [S*B, 12]
    # tau_ref                 : [S*B, 1]
    # geo_w_ref               : [12, 3H]
    # w_tau_ref               : [1, 3H]
    # whh_*                   : [H, 3H]   (gate order r|z|n along columns)
    # bhh_*                   : [1, 3H]
    # out_ref                 : [S*B, 2H] (cols 0:H spatial, H:2H temporal)
    S, B = seq_len, batch
    H3 = gi_loc_ref.shape[1]
    H = H3 // 3

    # -- hoisted input projections for ALL timesteps (one MXU matmul total) --
    gi_sp = gi_loc_ref[...] + jnp.dot(geo_ref[...], geo_w_ref[...],
                                      preferred_element_type=jnp.float32)
    gi_tp = gi_tim_ref[...] + tau_ref[...] * w_tau_ref[...]

    whh_sp = whh_sp_ref[...]
    whh_tp = whh_tp_ref[...]
    bhh_sp = bhh_sp_ref[...]
    bhh_tp = bhh_tp_ref[...]

    h_sp = jnp.zeros((B, H), jnp.float32)
    h_tp = jnp.zeros((B, H), jnp.float32)

    # -- both recurrences interleaved in one fully-unrolled loop -------------
    # PyTorch GRU cell, gate order [r, z, n]:
    #   r = sigmoid(gi_r + h W_hr + b_hr)
    #   z = sigmoid(gi_z + h W_hz + b_hz)
    #   n = tanh   (gi_n + r * (h W_hn + b_hn))
    #   h' = (1 - z) * n + z * h
    for t in range(S):
        lo = t * B
        gi_sp_t = gi_sp[lo:lo + B]          # [B, 3H]
        gi_tp_t = gi_tp[lo:lo + B]

        # One [H, 3H] matmul per encoder per step; the two chains are
        # independent so the scheduler hides MXU / EUP latency of one behind
        # the other.
        gh_sp = jnp.dot(h_sp, whh_sp, preferred_element_type=jnp.float32) + bhh_sp
        gh_tp = jnp.dot(h_tp, whh_tp, preferred_element_type=jnp.float32) + bhh_tp

        # r and z share one fused sigmoid per encoder (single EUP issue).
        rz_sp = jax.nn.sigmoid(gi_sp_t[:, :2 * H] + gh_sp[:, :2 * H])
        rz_tp = jax.nn.sigmoid(gi_tp_t[:, :2 * H] + gh_tp[:, :2 * H])

        n_sp = jnp.tanh(gi_sp_t[:, 2 * H:] + rz_sp[:, :H] * gh_sp[:, 2 * H:])
        n_tp = jnp.tanh(gi_tp_t[:, 2 * H:] + rz_tp[:, :H] * gh_tp[:, 2 * H:])

        z_sp = rz_sp[:, H:2 * H]
        z_tp = rz_tp[:, H:2 * H]
        h_sp = (1.0 - z_sp) * n_sp + z_sp * h_sp
        h_tp = (1.0 - z_tp) * n_tp + z_tp * h_tp

        out_ref[lo:lo + B, 0:H] = h_sp
        out_ref[lo:lo + B, H:2 * H] = h_tp


def fused_dual_gru(gi_loc, gi_tim, geo, tau, geo_w, w_tau,
                   whh_sp, whh_tp, bhh_sp, bhh_tp, *, seq_len, batch):
    """All activations [S*B, *] f32 (row = t*B + b).  Returns [S*B, 2H]."""
    M, H3 = gi_loc.shape
    H = H3 // 3
    kernel = functools.partial(_fused_dual_gru_kernel, seq_len=seq_len, batch=batch)
    return pl.pallas_call(
        kernel,
        out_shape=jax.ShapeDtypeStruct((M, 2 * H), jnp.float32),
    )(gi_loc, gi_tim, geo, tau, geo_w, w_tau, whh_sp, whh_tp, bhh_sp, bhh_tp)


# ----------------------------------------------------------------------------
# Pallas kernel 2: POI head (dense + log-softmax)
# ----------------------------------------------------------------------------
def _dense_logsoftmax_kernel(x_ref, w_ref, b_ref, o_ref):
    logits = (jnp.dot(x_ref[...], w_ref[...], preferred_element_type=jnp.float32)
              + b_ref[...])
    m = jnp.max(logits, axis=-1, keepdims=True)
    s = logits - m
    lse = jnp.log(jnp.sum(jnp.exp(s), axis=-1, keepdims=True))
    o_ref[...] = s - lse


def dense_logsoftmax(x, w_t, b):
    """x: [N, F], w_t: [F, L], b: [L] -> log_softmax(x @ w_t + b) : [N, L]."""
    # TODO(synk): for a realistic POI vocabulary (L >= 10k), tile over L with a
    # grid axis marked 'arbitrary' + online max/LSE accumulators in VMEM
    # scratch (tileL ~2048 on v7x / ~4096-8192 on v6e) and raise
    # vmem_limit_bytes; untiled [F, L] weights would blow VMEM on v7x.
    N, F = x.shape
    L = w_t.shape[1]
    return pl.pallas_call(
        _dense_logsoftmax_kernel,
        out_shape=jax.ShapeDtypeStruct((N, L), jnp.float32),
    )(x, w_t, b.reshape(1, L))


# ----------------------------------------------------------------------------
# Parameter construction (deterministic, synthetic) + init-time constant folds
# ----------------------------------------------------------------------------
def make_params(key, cfg):
    H = cfg["hidden_size"]
    keys = jax.random.split(key, 24)
    ki = iter(keys)

    def nrm(k, shape, scale=0.1):
        return (scale * jax.random.normal(k, shape)).astype(jnp.float32)

    p = {}
    p["emb_loc"] = nrm(next(ki), (cfg["loc_size"], cfg["loc_emb_size"]))
    p["emb_tim"] = nrm(next(ki), (cfg["tim_size"], cfg["tim_emb_size"]))
    p["emb_user"] = nrm(next(ki), (cfg["uid_size"], cfg["user_emb_size"]))

    # Linear layers (stored pre-transposed: [in, out])
    p["geohash_w"] = nrm(next(ki), (12, cfg["geohash_size"]))
    p["geohash_b"] = nrm(next(ki), (cfg["geohash_size"],))
    p["category_w"] = nrm(next(ki), (768, cfg["category_size"]), scale=0.02)
    p["category_b"] = nrm(next(ki), (cfg["category_size"],))

    rnn_in_spatial = cfg["loc_emb_size"] + cfg["geohash_size"] + cfg["category_size"]
    rnn_in_temporal = cfg["tim_emb_size"] + 1

    # GRU weights, gate order [r, z, n]; stored as [D, 3H] / [H, 3H]
    p["sp_w_ih"] = nrm(next(ki), (rnn_in_spatial, 3 * H))
    p["sp_w_hh"] = nrm(next(ki), (H, 3 * H))
    p["sp_b_ih"] = nrm(next(ki), (3 * H,))
    p["sp_b_hh"] = nrm(next(ki), (3 * H,))

    p["tp_w_ih"] = nrm(next(ki), (rnn_in_temporal, 3 * H))   # row 0 = tau, rows 1: = tim
    p["tp_w_hh"] = nrm(next(ki), (H, 3 * H))
    p["tp_b_ih"] = nrm(next(ki), (3 * H,))
    p["tp_b_hh"] = nrm(next(ki), (3 * H,))

    # Final dense: in = 2*H + user_emb_size (POI), out = loc_size  (stored [in, out])
    dense_in = 2 * H + cfg["user_emb_size"]
    p["dense_w"] = nrm(next(ki), (dense_in, cfg["loc_size"]))
    p["dense_b"] = nrm(next(ki), (cfg["loc_size"],))
    return p


def make_tables(params, cfg):
    """One-time constant folding of all batch-independent matmuls.

    Exact w.r.t. the reference in test mode: loc/tim embedding, category dense
    and geohash dense feed the GRU input linearly (no nonlinearity / dropout).
    """
    Eloc = cfg["loc_emb_size"]
    G = cfg["geohash_size"]

    sp_w_ih = params["sp_w_ih"]                 # [Eloc+G+Ccat, 3H]
    w_sp_loc = sp_w_ih[:Eloc]
    w_sp_geo = sp_w_ih[Eloc:Eloc + G]
    w_sp_cat = sp_w_ih[Eloc + G:]
    tp_w_ih = params["tp_w_ih"]                 # [1+Etim, 3H]
    w_tp_tau = tp_w_ih[0:1]                     # [1, 3H]
    w_tp_tim = tp_w_ih[1:]                      # [Etim, 3H]

    cat_table = cfg["category_vector"] @ params["category_w"] + params["category_b"]
    loc_gi_table = (params["emb_loc"] @ w_sp_loc
                    + cat_table @ w_sp_cat
                    + params["sp_b_ih"][None, :]
                    + (params["geohash_b"] @ w_sp_geo)[None, :])     # [loc_size, 3H]
    tim_gi_table = params["emb_tim"] @ w_tp_tim + params["tp_b_ih"][None, :]  # [tim_size, 3H]
    geo_fold_w = params["geohash_w"] @ w_sp_geo                      # [12, 3H]

    return {
        "loc_gi_table": loc_gi_table.astype(jnp.float32),
        "tim_gi_table": tim_gi_table.astype(jnp.float32),
        "geo_fold_w": geo_fold_w.astype(jnp.float32),
        "w_tau": w_tp_tau.astype(jnp.float32),
        "sp_w_hh": params["sp_w_hh"],
        "tp_w_hh": params["tp_w_hh"],
        "sp_b_hh": params["sp_b_hh"].reshape(1, -1),
        "tp_b_hh": params["tp_b_hh"].reshape(1, -1),
        "emb_user": params["emb_user"],
        "dense_w": params["dense_w"],
        "dense_b": params["dense_b"],
    }


# ----------------------------------------------------------------------------
# Host-side (numpy) packed-sequence bookkeeping — static lengths, done once
# ----------------------------------------------------------------------------
def prepare_host_inputs(batch, S, B):
    all_len = batch["X_lengths"]
    cur_len = batch["target_lengths"]

    X_tau = np.asarray(batch["X_tau"])
    Y_tau = np.asarray(batch["Y_tau"])
    all_tau = np.zeros((B, S), dtype=np.float32)
    for i in range(B):
        h = all_len[i] - cur_len[i]
        all_tau[i, :h] = X_tau[i, :h]
        all_tau[i, h:all_len[i]] = Y_tau[i, :cur_len[i]]

    # Flat row indices (row = t*B + b) of the target-window GRU outputs, in the
    # same order the reference concatenates them, plus the per-row batch index
    # used to repeat the user embedding.
    tgt_idx, rep_idx = [], []
    for i in range(B):
        for t in range(all_len[i] - cur_len[i], all_len[i]):
            tgt_idx.append(t * B + i)
            rep_idx.append(i)

    loc_T = np.asarray(batch["X_all_loc"]).T.reshape(-1).astype(np.int32)          # [S*B]
    tim_T = np.asarray(batch["X_all_tim"]).T.reshape(-1).astype(np.int32)          # [S*B]
    geo_T = np.asarray(batch["X_all_geohash"]).transpose(1, 0, 2).reshape(S * B, -1).astype(np.float32)
    tau_T = all_tau.T.reshape(S * B, 1)

    return (jnp.asarray(loc_T), jnp.asarray(tim_T), jnp.asarray(geo_T),
            jnp.asarray(tau_T),
            jnp.asarray(np.asarray(tgt_idx, np.int32)),
            jnp.asarray(np.asarray(rep_idx, np.int32)))


# ----------------------------------------------------------------------------
# STCCR forward (test mode, downstream='POI') — single jitted device function
# ----------------------------------------------------------------------------
def build_forward(S, B):
    def forward(tables, loc_T, tim_T, geo_T, tau_T, user, rep_idx, tgt_idx, y):
        # -- gi projections reduced to gathers (tables fold the matmuls) -----
        gi_loc = tables["loc_gi_table"][loc_T]            # [S*B, 3H]
        gi_tim = tables["tim_gi_table"][tim_T]            # [S*B, 3H]
        user_rows = tables["emb_user"][user[rep_idx]]     # [N, Euser]

        # -- fused gi completion + dual interleaved GRU (Pallas kernel 1) ----
        # Padded steps beyond all_len[i] advance h but are never read, which
        # matches pack/pad_packed semantics because padding is trailing.
        gru_out = fused_dual_gru(
            gi_loc, gi_tim, geo_T, tau_T,
            tables["geo_fold_w"], tables["w_tau"],
            tables["sp_w_hh"], tables["tp_w_hh"],
            tables["sp_b_hh"], tables["tp_b_hh"],
            seq_len=S, batch=B)                           # [S*B, 2H]

        # -- target-window rows via one precomputed flat gather --------------
        rows = jnp.take(gru_out, tgt_idx, axis=0)         # [N, 2H] = [sp | tp]
        pred_in = jnp.concatenate([rows, user_rows], axis=1)

        # -- POI head: dense + log-softmax (Pallas kernel 2) ------------------
        pred = dense_logsoftmax(pred_in, tables["dense_w"], tables["dense_b"])

        # -- NLL loss (mean) + top-k (= full argsort descending) -------------
        nll = -jnp.mean(jnp.take_along_axis(pred, y[:, None], axis=1))
        top_k_pred = jnp.argsort(-pred, axis=1)
        return nll, top_k_pred

    # TODO(synk): training-only branches (SwAV/sinkhorn prototypes, contrastive
    # losses, momentum temporal encoder, dropouts) are not exercised in mode='test'.
    return jax.jit(forward)


# ----------------------------------------------------------------------------
# main
# ----------------------------------------------------------------------------
if __name__ == "__main__":
    key = jax.random.PRNGKey(0)
    k_cat, k_par, k_loc, k_tim, k_usr, k_geo, k_xtau, k_ytau, k_yl = jax.random.split(key, 9)

    cfg = {
        "loc_size": 32, "loc_emb_size": 16,
        "tim_size": 24, "tim_emb_size": 16,
        "uid_size": 8, "user_emb_size": 8,
        "category_size": 16, "geohash_size": 8,
        "hidden_size": 32,
    }
    cfg["category_vector"] = (0.1 * jax.random.normal(k_cat, (cfg["loc_size"], 768))).astype(jnp.float32)

    params = make_params(k_par, cfg)
    tables = make_tables(params, cfg)   # one-time constant folds (not on the hot path)

    B, S = 2, 8
    all_len = [8, 6]
    cur_len = [3, 4]
    N = sum(cur_len)

    batch = {
        "X_all_loc": jax.random.randint(k_loc, (B, S), 0, cfg["loc_size"], dtype=jnp.int32),
        "X_all_tim": jax.random.randint(k_tim, (B, S), 0, cfg["tim_size"], dtype=jnp.int32),
        "X_users": jax.random.randint(k_usr, (B,), 0, cfg["uid_size"], dtype=jnp.int32),
        "X_all_geohash": jax.random.normal(k_geo, (B, S, 12)).astype(jnp.float32),
        "X_tau": jax.random.uniform(k_xtau, (B, S)).astype(jnp.float32),
        "Y_tau": jax.random.uniform(k_ytau, (B, max(cur_len))).astype(jnp.float32),
        "Y_location": jax.random.randint(k_yl, (N,), 0, cfg["loc_size"], dtype=jnp.int32),
        "target_lengths": cur_len,
        "X_lengths": all_len,
    }

    loc_T, tim_T, geo_T, tau_T, tgt_idx, rep_idx = prepare_host_inputs(batch, S, B)
    forward = build_forward(S, B)

    loss, top_k_pred = forward(tables, loc_T, tim_T, geo_T, tau_T,
                               batch["X_users"], rep_idx, tgt_idx, batch["Y_location"])
    queue = None
    jax.block_until_ready(loss)
    jax.block_until_ready(top_k_pred)

    assert top_k_pred.shape == (N, cfg["loc_size"])
    assert bool(jnp.isfinite(loss))
    print("KERNEL_OK")
</pallas_src>

<mosaic_0001>
module attributes {stable_mosaic.version = 11 : i64} {
  func.func @_fused_dual_gru_kernel(%arg0: memref<16x96xf32, #tpu.memory_space<vmem>>, %arg1: memref<16x96xf32, #tpu.memory_space<vmem>>, %arg2: memref<16x12xf32, #tpu.memory_space<vmem>>, %arg3: memref<16x1xf32, #tpu.memory_space<vmem>>, %arg4: memref<12x96xf32, #tpu.memory_space<vmem>>, %arg5: memref<1x96xf32, #tpu.memory_space<vmem>>, %arg6: memref<32x96xf32, #tpu.memory_space<vmem>>, %arg7: memref<32x96xf32, #tpu.memory_space<vmem>>, %arg8: memref<1x96xf32, #tpu.memory_space<vmem>>, %arg9: memref<1x96xf32, #tpu.memory_space<vmem>>, %arg10: memref<16x64xf32, #tpu.memory_space<vmem>>) attributes {dimension_semantics = [], scalar_prefetch = 0 : i64, scratch_operands = 0 : i64, tpu.core_type = #tpu.core_type<tc>} {
    %c0 = arith.constant 0 : index
    %c0_0 = arith.constant 0 : index
    %0 = vector.load %arg0[%c0, %c0_0] : memref<16x96xf32, #tpu.memory_space<vmem>>, vector<16x96xf32>
    %c0_1 = arith.constant 0 : index
    %c0_2 = arith.constant 0 : index
    %1 = vector.load %arg2[%c0_1, %c0_2] : memref<16x12xf32, #tpu.memory_space<vmem>>, vector<16x12xf32>
    %c0_3 = arith.constant 0 : index
    %c0_4 = arith.constant 0 : index
    %2 = vector.load %arg4[%c0_3, %c0_4] : memref<12x96xf32, #tpu.memory_space<vmem>>, vector<12x96xf32>
    %cst = arith.constant dense<0.000000e+00> : vector<16x96xf32>
    %3 = tpu.matmul %1, %2, %cst {dimension_numbers = #tpu.dot_dimension_numbers<[1], [0], [0], [1], [0, 0, 1, 1], [], []>} : vector<16x12xf32>, vector<12x96xf32>, vector<16x96xf32> -> vector<16x96xf32>
    %4 = arith.addf %0, %3 : vector<16x96xf32>
    %c0_5 = arith.constant 0 : index
    %c0_6 = arith.constant 0 : index
    %5 = vector.load %arg1[%c0_5, %c0_6] : memref<16x96xf32, #tpu.memory_space<vmem>>, vector<16x96xf32>
    %c0_7 = arith.constant 0 : index
    %c0_8 = arith.constant 0 : index
    %6 = vector.load %arg3[%c0_7, %c0_8] : memref<16x1xf32, #tpu.memory_space<vmem>>, vector<16x1xf32>
    %c0_9 = arith.constant 0 : index
    %c0_10 = arith.constant 0 : index
    %7 = vector.load %arg5[%c0_9, %c0_10] : memref<1x96xf32, #tpu.memory_space<vmem>>, vector<1x96xf32>
    %8 = vector.broadcast %6 : vector<16x1xf32> to vector<16x96xf32>
    %9 = vector.broadcast %7 : vector<1x96xf32> to vector<16x96xf32>
    %10 = arith.mulf %8, %9 : vector<16x96xf32>
    %11 = arith.addf %5, %10 : vector<16x96xf32>
    %c0_11 = arith.constant 0 : index
    %c0_12 = arith.constant 0 : index
    %12 = vector.load %arg6[%c0_11, %c0_12] : memref<32x96xf32, #tpu.memory_space<vmem>>, vector<32x96xf32>
    %c0_13 = arith.constant 0 : index
    %c0_14 = arith.constant 0 : index
    %13 = vector.load %arg7[%c0_13, %c0_14] : memref<32x96xf32, #tpu.memory_space<vmem>>, vector<32x96xf32>
    %c0_15 = arith.constant 0 : index
    %c0_16 = arith.constant 0 : index
    %14 = vector.load %arg8[%c0_15, %c0_16] : memref<1x96xf32, #tpu.memory_space<vmem>>, vector<1x96xf32>
    %c0_17 = arith.constant 0 : index
    %c0_18 = arith.constant 0 : index
    %15 = vector.load %arg9[%c0_17, %c0_18] : memref<1x96xf32, #tpu.memory_space<vmem>>, vector<1x96xf32>
    %cst_19 = arith.constant 0.000000e+00 : f32
    %16 = vector.broadcast %cst_19 : f32 to vector<2x32xf32>
    %cst_20 = arith.constant 0.000000e+00 : f32
    %17 = vector.broadcast %cst_20 : f32 to vector<2x32xf32>
    %18 = vector.extract_strided_slice %4 {offsets = [0, 0], sizes = [2, 96], strides = [1, 1]} : vector<16x96xf32> to vector<2x96xf32>
    %19 = vector.extract_strided_slice %11 {offsets = [0, 0], sizes = [2, 96], strides = [1, 1]} : vector<16x96xf32> to vector<2x96xf32>
    %cst_21 = arith.constant dense<0.000000e+00> : vector<2x96xf32>
    %20 = tpu.matmul %16, %12, %cst_21 {dimension_numbers = #tpu.dot_dimension_numbers<[1], [0], [0], [1], [0, 0, 1, 1], [], []>} : vector<2x32xf32>, vector<32x96xf32>, vector<2x96xf32> -> vector<2x96xf32>
    %21 = vector.broadcast %14 : vector<1x96xf32> to vector<2x96xf32>
    %22 = arith.addf %20, %21 : vector<2x96xf32>
    %cst_22 = arith.constant dense<0.000000e+00> : vector<2x96xf32>
    %23 = tpu.matmul %17, %13, %cst_22 {dimension_numbers = #tpu.dot_dimension_numbers<[1], [0], [0], [1], [0, 0, 1, 1], [], []>} : vector<2x32xf32>, vector<32x96xf32>, vector<2x96xf32> -> vector<2x96xf32>
    %24 = vector.broadcast %15 : vector<1x96xf32> to vector<2x96xf32>
    %25 = arith.addf %23, %24 : vector<2x96xf32>
    %26 = vector.extract_strided_slice %18 {offsets = [0, 0], sizes = [2, 64], strides = [1, 1]} : vector<2x96xf32> to vector<2x64xf32>
    %27 = vector.extract_strided_slice %22 {offsets = [0, 0], sizes = [2, 64], strides = [1, 1]} : vector<2x96xf32> to vector<2x64xf32>
    %28 = arith.addf %26, %27 : vector<2x64xf32>
    %29 = arith.negf %28 : vector<2x64xf32>
    %30 = math.exp %29 : vector<2x64xf32>
    %cst_23 = arith.constant 1.000000e+00 : f32
    %31 = vector.broadcast %cst_23 : f32 to vector<2x64xf32>
    %32 = arith.addf %31, %30 : vector<2x64xf32>
    %33 = arith.divf %31, %32 : vector<2x64xf32>
    %34 = vector.extract_strided_slice %19 {offsets = [0, 0], sizes = [2, 64], strides = [1, 1]} : vector<2x96xf32> to vector<2x64xf32>
    %35 = vector.extract_strided_slice %25 {offsets = [0, 0], sizes = [2, 64], strides = [1, 1]} : vector<2x96xf32> to vector<2x64xf32>
    %36 = arith.addf %34, %35 : vector<2x64xf32>
    %37 = arith.negf %36 : vector<2x64xf32>
    %38 = math.exp %37 : vector<2x64xf32>
    %cst_24 = arith.constant 1.000000e+00 : f32
    %39 = vector.broadcast %cst_24 : f32 to vector<2x64xf32>
    %40 = arith.addf %39, %38 : vector<2x64xf32>
    %41 = arith.divf %39, %40 : vector<2x64xf32>
    %42 = vector.extract_strided_slice %18 {offsets = [0, 64], sizes = [2, 32], strides = [1, 1]} : vector<2x96xf32> to vector<2x32xf32>
    %43 = vector.extract_strided_slice %33 {offsets = [0, 0], sizes = [2, 32], strides = [1, 1]} : vector<2x64xf32> to vector<2x32xf32>
    %44 = vector.extract_strided_slice %22 {offsets = [0, 64], sizes = [2, 32], strides = [1, 1]} : vector<2x96xf32> to vector<2x32xf32>
    %45 = arith.mulf %43, %44 : vector<2x32xf32>
    %46 = arith.addf %42, %45 : vector<2x32xf32>
    %47 = math.tanh %46 : vector<2x32xf32>
    %48 = vector.extract_strided_slice %19 {offsets = [0, 64], sizes = [2, 32], strides = [1, 1]} : vector<2x96xf32> to vector<2x32xf32>
    %49 = vector.extract_strided_slice %41 {offsets = [0, 0], sizes = [2, 32], strides = [1, 1]} : vector<2x64xf32> to vector<2x32xf32>
    %50 = vector.extract_strided_slice %25 {offsets = [0, 64], sizes = [2, 32], strides = [1, 1]} : vector<2x96xf32> to vector<2x32xf32>
    %51 = arith.mulf %49, %50 : vector<2x32xf32>
    %52 = arith.addf %48, %51 : vector<2x32xf32>
    %53 = math.tanh %52 : vector<2x32xf32>
    %54 = vector.extract_strided_slice %33 {offsets = [0, 32], sizes = [2, 32], strides = [1, 1]} : vector<2x64xf32> to vector<2x32xf32>
    %55 = vector.extract_strided_slice %41 {offsets = [0, 32], sizes = [2, 32], strides = [1, 1]} : vector<2x64xf32> to vector<2x32xf32>
    %cst_25 = arith.constant 1.000000e+00 : f32
    %56 = vector.broadcast %cst_25 : f32 to vector<2x32xf32>
    %57 = arith.subf %56, %54 : vector<2x32xf32>
    %58 = arith.mulf %57, %47 : vector<2x32xf32>
    %59 = arith.mulf %54, %16 : vector<2x32xf32>
    %60 = arith.addf %58, %59 : vector<2x32xf32>
    %cst_26 = arith.constant 1.000000e+00 : f32
    %61 = vector.broadcast %cst_26 : f32 to vector<2x32xf32>
    %62 = arith.subf %61, %55 : vector<2x32xf32>
    %63 = arith.mulf %62, %53 : vector<2x32xf32>
    %64 = arith.mulf %55, %17 : vector<2x32xf32>
    %65 = arith.addf %63, %64 : vector<2x32xf32>
    %c0_27 = arith.constant 0 : index
    %c0_28 = arith.constant 0 : index
    %66 = vector.load %arg10[%c0_27, %c0_28] : memref<16x64xf32, #tpu.memory_space<vmem>>, vector<2x32xf32>
    tpu.vector_store %arg10[%c0_27, %c0_28], %60 {strides = array<i32>} : memref<16x64xf32, #tpu.memory_space<vmem>>, vector<2x32xf32>,
    %c0_29 = arith.constant 0 : index
    %c32 = arith.constant 32 : index
    %67 = vector.load %arg10[%c0_29, %c32] : memref<16x64xf32, #tpu.memory_space<vmem>>, vector<2x32xf32>
    tpu.vector_store %arg10[%c0_29, %c32], %65 {strides = array<i32>} : memref<16x64xf32, #tpu.memory_space<vmem>>, vector<2x32xf32>,
    %68 = vector.extract_strided_slice %4 {offsets = [2, 0], sizes = [2, 96], strides = [1, 1]} : vector<16x96xf32> to vector<2x96xf32>
    %69 = vector.extract_strided_slice %11 {offsets = [2, 0], sizes = [2, 96], strides = [1, 1]} : vector<16x96xf32> to vector<2x96xf32>
    %cst_30 = arith.constant dense<0.000000e+00> : vector<2x96xf32>
    %70 = tpu.matmul %60, %12, %cst_30 {dimension_numbers = #tpu.dot_dimension_numbers<[1], [0], [0], [1], [0, 0, 1, 1], [], []>} : vector<2x32xf32>, vector<32x96xf32>, vector<2x96xf32> -> vector<2x96xf32>
    %71 = vector.broadcast %14 : vector<1x96xf32> to vector<2x96xf32>
    %72 = arith.addf %70, %71 : vector<2x96xf32>
    %cst_31 = arith.constant dense<0.000000e+00> : vector<2x96xf32>
    %73 = tpu.matmul %65, %13, %cst_31 {dimension_numbers = #tpu.dot_dimension_numbers<[1], [0], [0], [1], [0, 0, 1, 1], [], []>} : vector<2x32xf32>, vector<32x96xf32>, vector<2x96xf32> -> vector<2x96xf32>
    %74 = vector.broadcast %15 : vector<1x96xf32> to vector<2x96xf32>
    %75 = arith.addf %73, %74 : vector<2x96xf32>
    %76 = vector.extract_strided_slice %68 {offsets = [0, 0], sizes = [2, 64], strides = [1, 1]} : vector<2x96xf32> to vector<2x64xf32>
    %77 = vector.extract_strided_slice %72 {offsets = [0, 0], sizes = [2, 64], strides = [1, 1]} : vector<2x96xf32> to vector<2x64xf32>
    %78 = arith.addf %76, %77 : vector<2x64xf32>
    %79 = arith.negf %78 : vector<2x64xf32>
    %80 = math.exp %79 : vector<2x64xf32>
    %cst_32 = arith.constant 1.000000e+00 : f32
    %81 = vector.broadcast %cst_32 : f32 to vector<2x64xf32>
    %82 = arith.addf %81, %80 : vector<2x64xf32>
    %83 = arith.divf %81, %82 : vector<2x64xf32>
    %84 = vector.extract_strided_slice %69 {offsets = [0, 0], sizes = [2, 64], strides = [1, 1]} : vector<2x96xf32> to vector<2x64xf32>
    %85 = vector.extract_strided_slice %75 {offsets = [0, 0], sizes = [2, 64], strides = [1, 1]} : vector<2x96xf32> to vector<2x64xf32>
    %86 = arith.addf %84, %85 : vector<2x64xf32>
    %87 = arith.negf %86 : vector<2x64xf32>
    %88 = math.exp %87 : vector<2x64xf32>
    %cst_33 = arith.constant 1.000000e+00 : f32
    %89 = vector.broadcast %cst_33 : f32 to vector<2x64xf32>
    %90 = arith.addf %89, %88 : vector<2x64xf32>
    %91 = arith.divf %89, %90 : vector<2x64xf32>
    %92 = vector.extract_strided_slice %68 {offsets = [0, 64], sizes = [2, 32], strides = [1, 1]} : vector<2x96xf32> to vector<2x32xf32>
    %93 = vector.extract_strided_slice %83 {offsets = [0, 0], sizes = [2, 32], strides = [1, 1]} : vector<2x64xf32> to vector<2x32xf32>
    %94 = vector.extract_strided_slice %72 {offsets = [0, 64], sizes = [2, 32], strides = [1, 1]} : vector<2x96xf32> to vector<2x32xf32>
    %95 = arith.mulf %93, %94 : vector<2x32xf32>
    %96 = arith.addf %92, %95 : vector<2x32xf32>
    %97 = math.tanh %96 : vector<2x32xf32>
    %98 = vector.extract_strided_slice %69 {offsets = [0, 64], sizes = [2, 32], strides = [1, 1]} : vector<2x96xf32> to vector<2x32xf32>
    %99 = vector.extract_strided_slice %91 {offsets = [0, 0], sizes = [2, 32], strides = [1, 1]} : vector<2x64xf32> to vector<2x32xf32>
    %100 = vector.extract_strided_slice %75 {offsets = [0, 64], sizes = [2, 32], strides = [1, 1]} : vector<2x96xf32> to vector<2x32xf32>
    %101 = arith.mulf %99, %100 : vector<2x32xf32>
    %102 = arith.addf %98, %101 : vector<2x32xf32>
    %103 = math.tanh %102 : vector<2x32xf32>
    %104 = vector.extract_strided_slice %83 {offsets = [0, 32], sizes = [2, 32], strides = [1, 1]} : vector<2x64xf32> to vector<2x32xf32>
    %105 = vector.extract_strided_slice %91 {offsets = [0, 32], sizes = [2, 32], strides = [1, 1]} : vector<2x64xf32> to vector<2x32xf32>
    %cst_34 = arith.constant 1.000000e+00 : f32
    %106 = vector.broadcast %cst_34 : f32 to vector<2x32xf32>
    %107 = arith.subf %106, %104 : vector<2x32xf32>
    %108 = arith.mulf %107, %97 : vector<2x32xf32>
    %109 = arith.mulf %104, %60 : vector<2x32xf32>
    %110 = arith.addf %108, %109 : vector<2x32xf32>
    %cst_35 = arith.constant 1.000000e+00 : f32
    %111 = vector.broadcast %cst_35 : f32 to vector<2x32xf32>
    %112 = arith.subf %111, %105 : vector<2x32xf32>
    %113 = arith.mulf %112, %103 : vector<2x32xf32>
    %114 = arith.mulf %105, %65 : vector<2x32xf32>
    %115 = arith.addf %113, %114 : vector<2x32xf32>
    %c2 = arith.constant 2 : index
    %c0_36 = arith.constant 0 : index
    %116 = vector.load %arg10[%c2, %c0_36] : memref<16x64xf32, #tpu.memory_space<vmem>>, vector<2x32xf32>
    tpu.vector_store %arg10[%c2, %c0_36], %110 {strides = array<i32>} : memref<16x64xf32, #tpu.memory_space<vmem>>, vector<2x32xf32>,
    %c2_37 = arith.constant 2 : index
    %c32_38 = arith.constant 32 : index
    %117 = vector.load %arg10[%c2_37, %c32_38] : memref<16x64xf32, #tpu.memory_space<vmem>>, vector<2x32xf32>
    tpu.vector_store %arg10[%c2_37, %c32_38], %115 {strides = array<i32>} : memref<16x64xf32, #tpu.memory_space<vmem>>, vector<2x32xf32>,
    %118 = vector.extract_strided_slice %4 {offsets = [4, 0], sizes = [2, 96], strides = [1, 1]} : vector<16x96xf32> to vector<2x96xf32>
    %119 = vector.extract_strided_slice %11 {offsets = [4, 0], sizes = [2, 96], strides = [1, 1]} : vector<16x96xf32> to vector<2x96xf32>
    %cst_39 = arith.constant dense<0.000000e+00> : vector<2x96xf32>
    %120 = tpu.matmul %110, %12, %cst_39 {dimension_numbers = #tpu.dot_dimension_numbers<[1], [0], [0], [1], [0, 0, 1, 1], [], []>} : vector<2x32xf32>, vector<32x96xf32>, vector<2x96xf32> -> vector<2x96xf32>
    %121 = vector.broadcast %14 : vector<1x96xf32> to vector<2x96xf32>
    %122 = arith.addf %120, %121 : vector<2x96xf32>
    %cst_40 = arith.constant dense<0.000000e+00> : vector<2x96xf32>
    %123 = tpu.matmul %115, %13, %cst_40 {dimension_numbers = #tpu.dot_dimension_numbers<[1], [0], [0], [1], [0, 0, 1, 1], [], []>} : vector<2x32xf32>, vector<32x96xf32>, vector<2x96xf32> -> vector<2x96xf32>
    %124 = vector.broadcast %15 : vector<1x96xf32> to vector<2x96xf32>
    %125 = arith.addf %123, %124 : vector<2x96xf32>
    %126 = vector.extract_strided_slice %118 {offsets = [0, 0], sizes = [2, 64], strides = [1, 1]} : vector<2x96xf32> to vector<2x64xf32>
    %127 = vector.extract_strided_slice %122 {offsets = [0, 0], sizes = [2, 64], strides = [1, 1]} : vector<2x96xf32> to vector<2x64xf32>
    %128 = arith.addf %126, %127 : vector<2x64xf32>
    %129 = arith.negf %128 : vector<2x64xf32>
    %130 = math.exp %129 : vector<2x64xf32>
    %cst_41 = arith.constant 1.000000e+00 : f32
    %131 = vector.broadcast %cst_41 : f32 to vector<2x64xf32>
    %132 = arith.addf %131, %130 : vector<2x64xf32>
    %133 = arith.divf %131, %132 : vector<2x64xf32>
    %134 = vector.extract_strided_slice %119 {offsets = [0, 0], sizes = [2, 64], strides = [1, 1]} : vector<2x96xf32> to vector<2x64xf32>
    %135 = vector.extract_strided_slice %125 {offsets = [0, 0], sizes = [2, 64], strides = [1, 1]} : vector<2x96xf32> to vector<2x64xf32>
    %136 = arith.addf %134, %135 : vector<2x64xf32>
    %137 = arith.negf %136 : vector<2x64xf32>
    %138 = math.exp %137 : vector<2x64xf32>
    %cst_42 = arith.constant 1.000000e+00 : f32
    %139 = vector.broadcast %cst_42 : f32 to vector<2x64xf32>
    %140 = arith.addf %139, %138 : vector<2x64xf32>
    %141 = arith.divf %139, %140 : vector<2x64xf32>
    %142 = vector.extract_strided_slice %118 {offsets = [0, 64], sizes = [2, 32], strides = [1, 1]} : vector<2x96xf32> to vector<2x32xf32>
    %143 = vector.extract_strided_slice %133 {offsets = [0, 0], sizes = [2, 32], strides = [1, 1]} : vector<2x64xf32> to vector<2x32xf32>
    %144 = vector.extract_strided_slice %122 {offsets = [0, 64], sizes = [2, 32], strides = [1, 1]} : vector<2x96xf32> to vector<2x32xf32>
    %145 = arith.mulf %143, %144 : vector<2x32xf32>
    %146 = arith.addf %142, %145 : vector<2x32xf32>
    %147 = math.tanh %146 : vector<2x32xf32>
    %148 = vector.extract_strided_slice %119 {offsets = [0, 64], sizes = [2, 32], strides = [1, 1]} : vector<2x96xf32> to vector<2x32xf32>
    %149 = vector.extract_strided_slice %141 {offsets = [0, 0], sizes = [2, 32], strides = [1, 1]} : vector<2x64xf32> to vector<2x32xf32>
    %150 = vector.extract_strided_slice %125 {offsets = [0, 64], sizes = [2, 32], strides = [1, 1]} : vector<2x96xf32> to vector<2x32xf32>
    %151 = arith.mulf %149, %150 : vector<2x32xf32>
    %152 = arith.addf %148, %151 : vector<2x32xf32>
    %153 = math.tanh %152 : vector<2x32xf32>
    %154 = vector.extract_strided_slice %133 {offsets = [0, 32], sizes = [2, 32], strides = [1, 1]} : vector<2x64xf32> to vector<2x32xf32>
    %155 = vector.extract_strided_slice %141 {offsets = [0, 32], sizes = [2, 32], strides = [1, 1]} : vector<2x64xf32> to vector<2x32xf32>
    %cst_43 = arith.constant 1.000000e+00 : f32
    %156 = vector.broadcast %cst_43 : f32 to vector<2x32xf32>
    %157 = arith.subf %156, %154 : vector<2x32xf32>
    %158 = arith.mulf %157, %147 : vector<2x32xf32>
    %159 = arith.mulf %154, %110 : vector<2x32xf32>
    %160 = arith.addf %158, %159 : vector<2x32xf32>
    %cst_44 = arith.constant 1.000000e+00 : f32
    %161 = vector.broadcast %cst_44 : f32 to vector<2x32xf32>
    %162 = arith.subf %161, %155 : vector<2x32xf32>
    %163 = arith.mulf %162, %153 : vector<2x32xf32>
    %164 = arith.mulf %155, %115 : vector<2x32xf32>
    %165 = arith.addf %163, %164 : vector<2x32xf32>
    %c4 = arith.constant 4 : index
    %c0_45 = arith.constant 0 : index
    %166 = vector.load %arg10[%c4, %c0_45] : memref<16x64xf32, #tpu.memory_space<vmem>>, vector<2x32xf32>
    tpu.vector_store %arg10[%c4, %c0_45], %160 {strides = array<i32>} : memref<16x64xf32, #tpu.memory_space<vmem>>, vector<2x32xf32>,
    %c4_46 = arith.constant 4 : index
    %c32_47 = arith.constant 32 : index
    %167 = vector.load %arg10[%c4_46, %c32_47] : memref<16x64xf32, #tpu.memory_space<vmem>>, vector<2x32xf32>
    tpu.vector_store %arg10[%c4_46, %c32_47], %165 {strides = array<i32>} : memref<16x64xf32, #tpu.memory_space<vmem>>, vector<2x32xf32>,
    %168 = vector.extract_strided_slice %4 {offsets = [6, 0], sizes = [2, 96], strides = [1, 1]} : vector<16x96xf32> to vector<2x96xf32>
    %169 = vector.extract_strided_slice %11 {offsets = [6, 0], sizes = [2, 96], strides = [1, 1]} : vector<16x96xf32> to vector<2x96xf32>
    %cst_48 = arith.constant dense<0.000000e+00> : vector<2x96xf32>
    %170 = tpu.matmul %160, %12, %cst_48 {dimension_numbers = #tpu.dot_dimension_numbers<[1], [0], [0], [1], [0, 0, 1, 1], [], []>} : vector<2x32xf32>, vector<32x96xf32>, vector<2x96xf32> -> vector<2x96xf32>
    %171 = vector.broadcast %14 : vector<1x96xf32> to vector<2x96xf32>
    %172 = arith.addf %170, %171 : vector<2x96xf32>
    %cst_49 = arith.constant dense<0.000000e+00> : vector<2x96xf32>
    %173 = tpu.matmul %165, %13, %cst_49 {dimension_numbers = #tpu.dot_dimension_numbers<[1], [0], [0], [1], [0, 0, 1, 1], [], []>} : vector<2x32xf32>, vector<32x96xf32>, vector<2x96xf32> -> vector<2x96xf32>
    %174 = vector.broadcast %15 : vector<1x96xf32> to vector<2x96xf32>
    %175 = arith.addf %173, %174 : vector<2x96xf32>
    %176 = vector.extract_strided_slice %168 {offsets = [0, 0], sizes = [2, 64], strides = [1, 1]} : vector<2x96xf32> to vector<2x64xf32>
    %177 = vector.extract_strided_slice %172 {offsets = [0, 0], sizes = [2, 64], strides = [1, 1]} : vector<2x96xf32> to vector<2x64xf32>
    %178 = arith.addf %176, %177 : vector<2x64xf32>
    %179 = arith.negf %178 : vector<2x64xf32>
    %180 = math.exp %179 : vector<2x64xf32>
    %cst_50 = arith.constant 1.000000e+00 : f32
    %181 = vector.broadcast %cst_50 : f32 to vector<2x64xf32>
    %182 = arith.addf %181, %180 : vector<2x64xf32>
    %183 = arith.divf %181, %182 : vector<2x64xf32>
    %184 = vector.extract_strided_slice %169 {offsets = [0, 0], sizes = [2, 64], strides = [1, 1]} : vector<2x96xf32> to vector<2x64xf32>
    %185 = vector.extract_strided_slice %175 {offsets = [0, 0], sizes = [2, 64], strides = [1, 1]} : vector<2x96xf32> to vector<2x64xf32>
    %186 = arith.addf %184, %185 : vector<2x64xf32>
    %187 = arith.negf %186 : vector<2x64xf32>
    %188 = math.exp %187 : vector<2x64xf32>
    %cst_51 = arith.constant 1.000000e+00 : f32
    %189 = vector.broadcast %cst_51 : f32 to vector<2x64xf32>
    %190 = arith.addf %189, %188 : vector<2x64xf32>
    %191 = arith.divf %189, %190 : vector<2x64xf32>
    %192 = vector.extract_strided_slice %168 {offsets = [0, 64], sizes = [2, 32], strides = [1, 1]} : vector<2x96xf32> to vector<2x32xf32>
    %193 = vector.extract_strided_slice %183 {offsets = [0, 0], sizes = [2, 32], strides = [1, 1]} : vector<2x64xf32> to vector<2x32xf32>
    %194 = vector.extract_strided_slice %172 {offsets = [0, 64], sizes = [2, 32], strides = [1, 1]} : vector<2x96xf32> to vector<2x32xf32>
    %195 = arith.mulf %193, %194 : vector<2x32xf32>
    %196 = arith.addf %192, %195 : vector<2x32xf32>
    %197 = math.tanh %196 : vector<2x32xf32>
    %198 = vector.extract_strided_slice %169 {offsets = [0, 64], sizes = [2, 32], strides = [1, 1]} : vector<2x96xf32> to vector<2x32xf32>
    %199 = vector.extract_strided_slice %191 {offsets = [0, 0], sizes = [2, 32], strides = [1, 1]} : vector<2x64xf32> to vector<2x32xf32>
    %200 = vector.extract_strided_slice %175 {offsets = [0, 64], sizes = [2, 32], strides = [1, 1]} : vector<2x96xf32> to vector<2x32xf32>
    %201 = arith.mulf %199, %200 : vector<2x32xf32>
    %202 = arith.addf %198, %201 : vector<2x32xf32>
    %203 = math.tanh %202 : vector<2x32xf32>
    %204 = vector.extract_strided_slice %183 {offsets = [0, 32], sizes = [2, 32], strides = [1, 1]} : vector<2x64xf32> to vector<2x32xf32>
    %205 = vector.extract_strided_slice %191 {offsets = [0, 32], sizes = [2, 32], strides = [1, 1]} : vector<2x64xf32> to vector<2x32xf32>
    %cst_52 = arith.constant 1.000000e+00 : f32
    %206 = vector.broadcast %cst_52 : f32 to vector<2x32xf32>
    %207 = arith.subf %206, %204 : vector<2x32xf32>
    %208 = arith.mulf %207, %197 : vector<2x32xf32>
    %209 = arith.mulf %204, %160 : vector<2x32xf32>
    %210 = arith.addf %208, %209 : vector<2x32xf32>
    %cst_53 = arith.constant 1.000000e+00 : f32
    %211 = vector.broadcast %cst_53 : f32 to vector<2x32xf32>
    %212 = arith.subf %211, %205 : vector<2x32xf32>
    %213 = arith.mulf %212, %203 : vector<2x32xf32>
    %214 = arith.mulf %205, %165 : vector<2x32xf32>
    %215 = arith.addf %213, %214 : vector<2x32xf32>
    %c6 = arith.constant 6 : index
    %c0_54 = arith.constant 0 : index
    %216 = vector.load %arg10[%c6, %c0_54] : memref<16x64xf32, #tpu.memory_space<vmem>>, vector<2x32xf32>
    tpu.vector_store %arg10[%c6, %c0_54], %210 {strides = array<i32>} : memref<16x64xf32, #tpu.memory_space<vmem>>, vector<2x32xf32>,
    %c6_55 = arith.constant 6 : index
    %c32_56 = arith.constant 32 : index
    %217 = vector.load %arg10[%c6_55, %c32_56] : memref<16x64xf32, #tpu.memory_space<vmem>>, vector<2x32xf32>
    tpu.vector_store %arg10[%c6_55, %c32_56], %215 {strides = array<i32>} : memref<16x64xf32, #tpu.memory_space<vmem>>, vector<2x32xf32>,
    %218 = vector.extract_strided_slice %4 {offsets = [8, 0], sizes = [2, 96], strides = [1, 1]} : vector<16x96xf32> to vector<2x96xf32>
    %219 = vector.extract_strided_slice %11 {offsets = [8, 0], sizes = [2, 96], strides = [1, 1]} : vector<16x96xf32> to vector<2x96xf32>
    %cst_57 = arith.constant dense<0.000000e+00> : vector<2x96xf32>
    %220 = tpu.matmul %210, %12, %cst_57 {dimension_numbers = #tpu.dot_dimension_numbers<[1], [0], [0], [1], [0, 0, 1, 1], [], []>} : vector<2x32xf32>, vector<32x96xf32>, vector<2x96xf32> -> vector<2x96xf32>
    %221 = vector.broadcast %14 : vector<1x96xf32> to vector<2x96xf32>
    %222 = arith.addf %220, %221 : vector<2x96xf32>
    %cst_58 = arith.constant dense<0.000000e+00> : vector<2x96xf32>
    %223 = tpu.matmul %215, %13, %cst_58 {dimension_numbers = #tpu.dot_dimension_numbers<[1], [0], [0], [1], [0, 0, 1, 1], [], []>} : vector<2x32xf32>, vector<32x96xf32>, vector<2x96xf32> -> vector<2x96xf32>
    %224 = vector.broadcast %15 : vector<1x96xf32> to vector<2x96xf32>
    %225 = arith.addf %223, %224 : vector<2x96xf32>
    %226 = vector.extract_strided_slice %218 {offsets = [0, 0], sizes = [2, 64], strides = [1, 1]} : vector<2x96xf32> to vector<2x64xf32>
    %227 = vector.extract_strided_slice %222 {offsets = [0, 0], sizes = [2, 64], strides = [1, 1]} : vector<2x96xf32> to vector<2x64xf32>
    %228 = arith.addf %226, %227 : vector<2x64xf32>
    %229 = arith.negf %228 : vector<2x64xf32>
    %230 = math.exp %229 : vector<2x64xf32>
    %cst_59 = arith.constant 1.000000e+00 : f32
    %231 = vector.broadcast %cst_59 : f32 to vector<2x64xf32>
    %232 = arith.addf %231, %230 : vector<2x64xf32>
    %233 = arith.divf %231, %232 : vector<2x64xf32>
    %234 = vector.extract_strided_slice %219 {offsets = [0, 0], sizes = [2, 64], strides = [1, 1]} : vector<2x96xf32> to vector<2x64xf32>
    %235 = vector.extract_strided_slice %225 {offsets = [0, 0], sizes = [2, 64], strides = [1, 1]} : vector<2x96xf32> to vector<2x64xf32>
    %236 = arith.addf %234, %235 : vector<2x64xf32>
    %237 = arith.negf %236 : vector<2x64xf32>
    %238 = math.exp %237 : vector<2x64xf32>
    %cst_60 = arith.constant 1.000000e+00 : f32
    %239 = vector.broadcast %cst_60 : f32 to vector<2x64xf32>
    %240 = arith.addf %239, %238 : vector<2x64xf32>
    %241 = arith.divf %239, %240 : vector<2x64xf32>
    %242 = vector.extract_strided_slice %218 {offsets = [0, 64], sizes = [2, 32], strides = [1, 1]} : vector<2x96xf32> to vector<2x32xf32>
    %243 = vector.extract_strided_slice %233 {offsets = [0, 0], sizes = [2, 32], strides = [1, 1]} : vector<2x64xf32> to vector<2x32xf32>
    %244 = vector.extract_strided_slice %222 {offsets = [0, 64], sizes = [2, 32], strides = [1, 1]} : vector<2x96xf32> to vector<2x32xf32>
    %245 = arith.mulf %243, %244 : vector<2x32xf32>
    %246 = arith.addf %242, %245 : vector<2x32xf32>
    %247 = math.tanh %246 : vector<2x32xf32>
    %248 = vector.extract_strided_slice %219 {offsets = [0, 64], sizes = [2, 32], strides = [1, 1]} : vector<2x96xf32> to vector<2x32xf32>
    %249 = vector.extract_strided_slice %241 {offsets = [0, 0], sizes = [2, 32], strides = [1, 1]} : vector<2x64xf32> to vector<2x32xf32>
    %250 = vector.extract_strided_slice %225 {offsets = [0, 64], sizes = [2, 32], strides = [1, 1]} : vector<2x96xf32> to vector<2x32xf32>
    %251 = arith.mulf %249, %250 : vector<2x32xf32>
    %252 = arith.addf %248, %251 : vector<2x32xf32>
    %253 = math.tanh %252 : vector<2x32xf32>
    %254 = vector.extract_strided_slice %233 {offsets = [0, 32], sizes = [2, 32], strides = [1, 1]} : vector<2x64xf32> to vector<2x32xf32>
    %255 = vector.extract_strided_slice %241 {offsets = [0, 32], sizes = [2, 32], strides = [1, 1]} : vector<2x64xf32> to vector<2x32xf32>
    %cst_61 = arith.constant 1.000000e+00 : f32
    %256 = vector.broadcast %cst_61 : f32 to vector<2x32xf32>
    %257 = arith.subf %256, %254 : vector<2x32xf32>
    %258 = arith.mulf %257, %247 : vector<2x32xf32>
    %259 = arith.mulf %254, %210 : vector<2x32xf32>
    %260 = arith.addf %258, %259 : vector<2x32xf32>
    %cst_62 = arith.constant 1.000000e+00 : f32
    %261 = vector.broadcast %cst_62 : f32 to vector<2x32xf32>
    %262 = arith.subf %261, %255 : vector<2x32xf32>
    %263 = arith.mulf %262, %253 : vector<2x32xf32>
    %264 = arith.mulf %255, %215 : vector<2x32xf32>
    %265 = arith.addf %263, %264 : vector<2x32xf32>
    %c8 = arith.constant 8 : index
    %c0_63 = arith.constant 0 : index
    %266 = vector.load %arg10[%c8, %c0_63] : memref<16x64xf32, #tpu.memory_space<vmem>>, vector<2x32xf32>
    tpu.vector_store %arg10[%c8, %c0_63], %260 {strides = array<i32>} : memref<16x64xf32, #tpu.memory_space<vmem>>, vector<2x32xf32>,
    %c8_64 = arith.constant 8 : index
    %c32_65 = arith.constant 32 : index
    %267 = vector.load %arg10[%c8_64, %c32_65] : memref<16x64xf32, #tpu.memory_space<vmem>>, vector<2x32xf32>
    tpu.vector_store %arg10[%c8_64, %c32_65], %265 {strides = array<i32>} : memref<16x64xf32, #tpu.memory_space<vmem>>, vector<2x32xf32>,
    %268 = vector.extract_strided_slice %4 {offsets = [10, 0], sizes = [2, 96], strides = [1, 1]} : vector<16x96xf32> to vector<2x96xf32>
    %269 = vector.extract_strided_slice %11 {offsets = [10, 0], sizes = [2, 96], strides = [1, 1]} : vector<16x96xf32> to vector<2x96xf32>
    %cst_66 = arith.constant dense<0.000000e+00> : vector<2x96xf32>
    %270 = tpu.matmul %260, %12, %cst_66 {dimension_numbers = #tpu.dot_dimension_numbers<[1], [0], [0], [1], [0, 0, 1, 1], [], []>} : vector<2x32xf32>, vector<32x96xf32>, vector<2x96xf32> -> vector<2x96xf32>
    %271 = vector.broadcast %14 : vector<1x96xf32> to vector<2x96xf32>
    %272 = arith.addf %270, %271 : vector<2x96xf32>
    %cst_67 = arith.constant dense<0.000000e+00> : vector<2x96xf32>
    %273 = tpu.matmul %265, %13, %cst_67 {dimension_numbers = #tpu.dot_dimension_numbers<[1], [0], [0], [1], [0, 0, 1, 1], [], []>} : vector<2x32xf32>, vector<32x96xf32>, vector<2x96xf32> -> vector<2x96xf32>
    %274 = vector.broadcast %15 : vector<1x96xf32> to vector<2x96xf32>
    %275 = arith.addf %273, %274 : vector<2x96xf32>
    %276 = vector.extract_strided_slice %268 {offsets = [0, 0], sizes = [2, 64], strides = [1, 1]} : vector<2x96xf32> to vector<2x64xf32>
    %277 = vector.extract_strided_slice %272 {offsets = [0, 0], sizes = [2, 64], strides = [1, 1]} : vector<2x96xf32> to vector<2x64xf32>
    %278 = arith.addf %276, %277 : vector<2x64xf32>
    %279 = arith.negf %278 : vector<2x64xf32>
    %280 = math.exp %279 : vector<2x64xf32>
    %cst_68 = arith.constant 1.000000e+00 : f32
    %281 = vector.broadcast %cst_68 : f32 to vector<2x64xf32>
    %282 = arith.addf %281, %280 : vector<2x64xf32>
    %283 = arith.divf %281, %282 : vector<2x64xf32>
    %284 = vector.extract_strided_slice %269 {offsets = [0, 0], sizes = [2, 64], strides = [1, 1]} : vector<2x96xf32> to vector<2x64xf32>
    %285 = vector.extract_strided_slice %275 {offsets = [0, 0], sizes = [2, 64], strides = [1, 1]} : vector<2x96xf32> to vector<2x64xf32>
    %286 = arith.addf %284, %285 : vector<2x64xf32>
    %287 = arith.negf %286 : vector<2x64xf32>
    %288 = math.exp %287 : vector<2x64xf32>
    %cst_69 = arith.constant 1.000000e+00 : f32
    %289 = vector.broadcast %cst_69 : f32 to vector<2x64xf32>
    %290 = arith.addf %289, %288 : vector<2x64xf32>
    %291 = arith.divf %289, %290 : vector<2x64xf32>
    %292 = vector.extract_strided_slice %268 {offsets = [0, 64], sizes = [2, 32], strides = [1, 1]} : vector<2x96xf32> to vector<2x32xf32>
    %293 = vector.extract_strided_slice %283 {offsets = [0, 0], sizes = [2, 32], strides = [1, 1]} : vector<2x64xf32> to vector<2x32xf32>
    %294 = vector.extract_strided_slice %272 {offsets = [0, 64], sizes = [2, 32], strides = [1, 1]} : vector<2x96xf32> to vector<2x32xf32>
    %295 = arith.mulf %293, %294 : vector<2x32xf32>
    %296 = arith.addf %292, %295 : vector<2x32xf32>
    %297 = math.tanh %296 : vector<2x32xf32>
    %298 = vector.extract_strided_slice %269 {offsets = [0, 64], sizes = [2, 32], strides = [1, 1]} : vector<2x96xf32> to vector<2x32xf32>
    %299 = vector.extract_strided_slice %291 {offsets = [0, 0], sizes = [2, 32], strides = [1, 1]} : vector<2x64xf32> to vector<2x32xf32>
    %300 = vector.extract_strided_slice %275 {offsets = [0, 64], sizes = [2, 32], strides = [1, 1]} : vector<2x96xf32> to vector<2x32xf32>
    %301 = arith.mulf %299, %300 : vector<2x32xf32>
    %302 = arith.addf %298, %301 : vector<2x32xf32>
    %303 = math.tanh %302 : vector<2x32xf32>
    %304 = vector.extract_strided_slice %283 {offsets = [0, 32], sizes = [2, 32], strides = [1, 1]} : vector<2x64xf32> to vector<2x32xf32>
    %305 = vector.extract_strided_slice %291 {offsets = [0, 32], sizes = [2, 32], strides = [1, 1]} : vector<2x64xf32> to vector<2x32xf32>
    %cst_70 = arith.constant 1.000000e+00 : f32
    %306 = vector.broadcast %cst_70 : f32 to vector<2x32xf32>
    %307 = arith.subf %306, %304 : vector<2x32xf32>
    %308 = arith.mulf %307, %297 : vector<2x32xf32>
    %309 = arith.mulf %304, %260 : vector<2x32xf32>
    %310 = arith.addf %308, %309 : vector<2x32xf32>
    %cst_71 = arith.constant 1.000000e+00 : f32
    %311 = vector.broadcast %cst_71 : f32 to vector<2x32xf32>
    %312 = arith.subf %311, %305 : vector<2x32xf32>
    %313 = arith.mulf %312, %303 : vector<2x32xf32>
    %314 = arith.mulf %305, %265 : vector<2x32xf32>
    %315 = arith.addf %313, %314 : vector<2x32xf32>
    %c10 = arith.constant 10 : index
    %c0_72 = arith.constant 0 : index
    %316 = vector.load %arg10[%c10, %c0_72] : memref<16x64xf32, #tpu.memory_space<vmem>>, vector<2x32xf32>
    tpu.vector_store %arg10[%c10, %c0_72], %310 {strides = array<i32>} : memref<16x64xf32, #tpu.memory_space<vmem>>, vector<2x32xf32>,
    %c10_73 = arith.constant 10 : index
    %c32_74 = arith.constant 32 : index
    %317 = vector.load %arg10[%c10_73, %c32_74] : memref<16x64xf32, #tpu.memory_space<vmem>>, vector<2x32xf32>
    tpu.vector_store %arg10[%c10_73, %c32_74], %315 {strides = array<i32>} : memref<16x64xf32, #tpu.memory_space<vmem>>, vector<2x32xf32>,
    %318 = vector.extract_strided_slice %4 {offsets = [12, 0], sizes = [2, 96], strides = [1, 1]} : vector<16x96xf32> to vector<2x96xf32>
    %319 = vector.extract_strided_slice %11 {offsets = [12, 0], sizes = [2, 96], strides = [1, 1]} : vector<16x96xf32> to vector<2x96xf32>
    %cst_75 = arith.constant dense<0.000000e+00> : vector<2x96xf32>
    %320 = tpu.matmul %310, %12, %cst_75 {dimension_numbers = #tpu.dot_dimension_numbers<[1], [0], [0], [1], [0, 0, 1, 1], [], []>} : vector<2x32xf32>, vector<32x96xf32>, vector<2x96xf32> -> vector<2x96xf32>
    %321 = vector.broadcast %14 : vector<1x96xf32> to vector<2x96xf32>
    %322 = arith.addf %320, %321 : vector<2x96xf32>
    %cst_76 = arith.constant dense<0.000000e+00> : vector<2x96xf32>
    %323 = tpu.matmul %315, %13, %cst_76 {dimension_numbers = #tpu.dot_dimension_numbers<[1], [0], [0], [1], [0, 0, 1, 1], [], []>} : vector<2x32xf32>, vector<32x96xf32>, vector<2x96xf32> -> vector<2x96xf32>
    %324 = vector.broadcast %15 : vector<1x96xf32> to vector<2x96xf32>
    %325 = arith.addf %323, %324 : vector<2x96xf32>
    %326 = vector.extract_strided_slice %318 {offsets = [0, 0], sizes = [2, 64], strides = [1, 1]} : vector<2x96xf32> to vector<2x64xf32>
    %327 = vector.extract_strided_slice %322 {offsets = [0, 0], sizes = [2, 64], strides = [1, 1]} : vector<2x96xf32> to vector<2x64xf32>
    %328 = arith.addf %326, %327 : vector<2x64xf32>
    %329 = arith.negf %328 : vector<2x64xf32>
    %330 = math.exp %329 : vector<2x64xf32>
    %cst_77 = arith.constant 1.000000e+00 : f32
    %331 = vector.broadcast %cst_77 : f32 to vector<2x64xf32>
    %332 = arith.addf %331, %330 : vector<2x64xf32>
    %333 = arith.divf %331, %332 : vector<2x64xf32>
    %334 = vector.extract_strided_slice %319 {offsets = [0, 0], sizes = [2, 64], strides = [1, 1]} : vector<2x96xf32> to vector<2x64xf32>
    %335 = vector.extract_strided_slice %325 {offsets = [0, 0], sizes = [2, 64], strides = [1, 1]} : vector<2x96xf32> to vector<2x64xf32>
    %336 = arith.addf %334, %335 : vector<2x64xf32>
    %337 = arith.negf %336 : vector<2x64xf32>
    %338 = math.exp %337 : vector<2x64xf32>
    %cst_78 = arith.constant 1.000000e+00 : f32
    %339 = vector.broadcast %cst_78 : f32 to vector<2x64xf32>
    %340 = arith.addf %339, %338 : vector<2x64xf32>
    %341 = arith.divf %339, %340 : vector<2x64xf32>
    %342 = vector.extract_strided_slice %318 {offsets = [0, 64], sizes = [2, 32], strides = [1, 1]} : vector<2x96xf32> to vector<2x32xf32>
    %343 = vector.extract_strided_slice %333 {offsets = [0, 0], sizes = [2, 32], strides = [1, 1]} : vector<2x64xf32> to vector<2x32xf32>
    %344 = vector.extract_strided_slice %322 {offsets = [0, 64], sizes = [2, 32], strides = [1, 1]} : vector<2x96xf32> to vector<2x32xf32>
    %345 = arith.mulf %343, %344 : vector<2x32xf32>
    %346 = arith.addf %342, %345 : vector<2x32xf32>
    %347 = math.tanh %346 : vector<2x32xf32>
    %348 = vector.extract_strided_slice %319 {offsets = [0, 64], sizes = [2, 32], strides = [1, 1]} : vector<2x96xf32> to vector<2x32xf32>
    %349 = vector.extract_strided_slice %341 {offsets = [0, 0], sizes = [2, 32], strides = [1, 1]} : vector<2x64xf32> to vector<2x32xf32>
    %350 = vector.extract_strided_slice %325 {offsets = [0, 64], sizes = [2, 32], strides = [1, 1]} : vector<2x96xf32> to vector<2x32xf32>
    %351 = arith.mulf %349, %350 : vector<2x32xf32>
    %352 = arith.addf %348, %351 : vector<2x32xf32>
    %353 = math.tanh %352 : vector<2x32xf32>
    %354 = vector.extract_strided_slice %333 {offsets = [0, 32], sizes = [2, 32], strides = [1, 1]} : vector<2x64xf32> to vector<2x32xf32>
    %355 = vector.extract_strided_slice %341 {offsets = [0, 32], sizes = [2, 32], strides = [1, 1]} : vector<2x64xf32> to vector<2x32xf32>
    %cst_79 = arith.constant 1.000000e+00 : f32
    %356 = vector.broadcast %cst_79 : f32 to vector<2x32xf32>
    %357 = arith.subf %356, %354 : vector<2x32xf32>
    %358 = arith.mulf %357, %347 : vector<2x32xf32>
    %359 = arith.mulf %354, %310 : vector<2x32xf32>
    %360 = arith.addf %358, %359 : vector<2x32xf32>
    %cst_80 = arith.constant 1.000000e+00 : f32
    %361 = vector.broadcast %cst_80 : f32 to vector<2x32xf32>
    %362 = arith.subf %361, %355 : vector<2x32xf32>
    %363 = arith.mulf %362, %353 : vector<2x32xf32>
    %364 = arith.mulf %355, %315 : vector<2x32xf32>
    %365 = arith.addf %363, %364 : vector<2x32xf32>
    %c12 = arith.constant 12 : index
    %c0_81 = arith.constant 0 : index
    %366 = vector.load %arg10[%c12, %c0_81] : memref<16x64xf32, #tpu.memory_space<vmem>>, vector<2x32xf32>
    tpu.vector_store %arg10[%c12, %c0_81], %360 {strides = array<i32>} : memref<16x64xf32, #tpu.memory_space<vmem>>, vector<2x32xf32>,
    %c12_82 = arith.constant 12 : index
    %c32_83 = arith.constant 32 : index
    %367 = vector.load %arg10[%c12_82, %c32_83] : memref<16x64xf32, #tpu.memory_space<vmem>>, vector<2x32xf32>
    tpu.vector_store %arg10[%c12_82, %c32_83], %365 {strides = array<i32>} : memref<16x64xf32, #tpu.memory_space<vmem>>, vector<2x32xf32>,
    %368 = vector.extract_strided_slice %4 {offsets = [14, 0], sizes = [2, 96], strides = [1, 1]} : vector<16x96xf32> to vector<2x96xf32>
    %369 = vector.extract_strided_slice %11 {offsets = [14, 0], sizes = [2, 96], strides = [1, 1]} : vector<16x96xf32> to vector<2x96xf32>
    %cst_84 = arith.constant dense<0.000000e+00> : vector<2x96xf32>
    %370 = tpu.matmul %360, %12, %cst_84 {dimension_numbers = #tpu.dot_dimension_numbers<[1], [0], [0], [1], [0, 0, 1, 1], [], []>} : vector<2x32xf32>, vector<32x96xf32>, vector<2x96xf32> -> vector<2x96xf32>
    %371 = vector.broadcast %14 : vector<1x96xf32> to vector<2x96xf32>
    %372 = arith.addf %370, %371 : vector<2x96xf32>
    %cst_85 = arith.constant dense<0.000000e+00> : vector<2x96xf32>
    %373 = tpu.matmul %365, %13, %cst_85 {dimension_numbers = #tpu.dot_dimension_numbers<[1], [0], [0], [1], [0, 0, 1, 1], [], []>} : vector<2x32xf32>, vector<32x96xf32>, vector<2x96xf32> -> vector<2x96xf32>
    %374 = vector.broadcast %15 : vector<1x96xf32> to vector<2x96xf32>
    %375 = arith.addf %373, %374 : vector<2x96xf32>
    %376 = vector.extract_strided_slice %368 {offsets = [0, 0], sizes = [2, 64], strides = [1, 1]} : vector<2x96xf32> to vector<2x64xf32>
    %377 = vector.extract_strided_slice %372 {offsets = [0, 0], sizes = [2, 64], strides = [1, 1]} : vector<2x96xf32> to vector<2x64xf32>
    %378 = arith.addf %376, %377 : vector<2x64xf32>
    %379 = arith.negf %378 : vector<2x64xf32>
    %380 = math.exp %379 : vector<2x64xf32>
    %cst_86 = arith.constant 1.000000e+00 : f32
    %381 = vector.broadcast %cst_86 : f32 to vector<2x64xf32>
    %382 = arith.addf %381, %380 : vector<2x64xf32>
    %383 = arith.divf %381, %382 : vector<2x64xf32>
    %384 = vector.extract_strided_slice %369 {offsets = [0, 0], sizes = [2, 64], strides = [1, 1]} : vector<2x96xf32> to vector<2x64xf32>
    %385 = vector.extract_strided_slice %375 {offsets = [0, 0], sizes = [2, 64], strides = [1, 1]} : vector<2x96xf32> to vector<2x64xf32>
    %386 = arith.addf %384, %385 : vector<2x64xf32>
    %387 = arith.negf %386 : vector<2x64xf32>
    %388 = math.exp %387 : vector<2x64xf32>
    %cst_87 = arith.constant 1.000000e+00 : f32
    %389 = vector.broadcast %cst_87 : f32 to vector<2x64xf32>
    %390 = arith.addf %389, %388 : vector<2x64xf32>
    %391 = arith.divf %389, %390 : vector<2x64xf32>
    %392 = vector.extract_strided_slice %368 {offsets = [0, 64], sizes = [2, 32], strides = [1, 1]} : vector<2x96xf32> to vector<2x32xf32>
    %393 = vector.extract_strided_slice %383 {offsets = [0, 0], sizes = [2, 32], strides = [1, 1]} : vector<2x64xf32> to vector<2x32xf32>
    %394 = vector.extract_strided_slice %372 {offsets = [0, 64], sizes = [2, 32], strides = [1, 1]} : vector<2x96xf32> to vector<2x32xf32>
    %395 = arith.mulf %393, %394 : vector<2x32xf32>
    %396 = arith.addf %392, %395 : vector<2x32xf32>
    %397 = math.tanh %396 : vector<2x32xf32>
    %398 = vector.extract_strided_slice %369 {offsets = [0, 64], sizes = [2, 32], strides = [1, 1]} : vector<2x96xf32> to vector<2x32xf32>
    %399 = vector.extract_strided_slice %391 {offsets = [0, 0], sizes = [2, 32], strides = [1, 1]} : vector<2x64xf32> to vector<2x32xf32>
    %400 = vector.extract_strided_slice %375 {offsets = [0, 64], sizes = [2, 32], strides = [1, 1]} : vector<2x96xf32> to vector<2x32xf32>
    %401 = arith.mulf %399, %400 : vector<2x32xf32>
    %402 = arith.addf %398, %401 : vector<2x32xf32>
    %403 = math.tanh %402 : vector<2x32xf32>
    %404 = vector.extract_strided_slice %383 {offsets = [0, 32], sizes = [2, 32], strides = [1, 1]} : vector<2x64xf32> to vector<2x32xf32>
    %405 = vector.extract_strided_slice %391 {offsets = [0, 32], sizes = [2, 32], strides = [1, 1]} : vector<2x64xf32> to vector<2x32xf32>
    %cst_88 = arith.constant 1.000000e+00 : f32
    %406 = vector.broadcast %cst_88 : f32 to vector<2x32xf32>
    %407 = arith.subf %406, %404 : vector<2x32xf32>
    %408 = arith.mulf %407, %397 : vector<2x32xf32>
    %409 = arith.mulf %404, %360 : vector<2x32xf32>
    %410 = arith.addf %408, %409 : vector<2x32xf32>
    %cst_89 = arith.constant 1.000000e+00 : f32
    %411 = vector.broadcast %cst_89 : f32 to vector<2x32xf32>
    %412 = arith.subf %411, %405 : vector<2x32xf32>
    %413 = arith.mulf %412, %403 : vector<2x32xf32>
    %414 = arith.mulf %405, %365 : vector<2x32xf32>
    %415 = arith.addf %413, %414 : vector<2x32xf32>
    %c14 = arith.constant 14 : index
    %c0_90 = arith.constant 0 : index
    %416 = vector.load %arg10[%c14, %c0_90] : memref<16x64xf32, #tpu.memory_space<vmem>>, vector<2x32xf32>
    tpu.vector_store %arg10[%c14, %c0_90], %410 {strides = array<i32>} : memref<16x64xf32, #tpu.memory_space<vmem>>, vector<2x32xf32>,
    %c14_91 = arith.constant 14 : index
    %c32_92 = arith.constant 32 : index
    %417 = vector.load %arg10[%c14_91, %c32_92] : memref<16x64xf32, #tpu.memory_space<vmem>>, vector<2x32xf32>
    tpu.vector_store %arg10[%c14_91, %c32_92], %415 {strides = array<i32>} : memref<16x64xf32, #tpu.memory_space<vmem>>, vector<2x32xf32>,
    return
  }
}

module attributes {stable_mosaic.version = 11 : i64} {
  func.func @_dense_logsoftmax_kernel(%arg0: memref<7x72xf32, #tpu.memory_space<vmem>>, %arg1: memref<72x32xf32, #tpu.memory_space<vmem>>, %arg2: memref<1x32xf32, #tpu.memory_space<vmem>>, %arg3: memref<7x32xf32, #tpu.memory_space<vmem>>) attributes {dimension_semantics = [], scalar_prefetch = 0 : i64, scratch_operands = 0 : i64, tpu.core_type = #tpu.core_type<tc>} {
    %c0 = arith.constant 0 : index
    %c0_0 = arith.constant 0 : index
    %0 = vector.load %arg0[%c0, %c0_0] : memref<7x72xf32, #tpu.memory_space<vmem>>, vector<7x72xf32>
    %c0_1 = arith.constant 0 : index
    %c0_2 = arith.constant 0 : index
    %1 = vector.load %arg1[%c0_1, %c0_2] : memref<72x32xf32, #tpu.memory_space<vmem>>, vector<72x32xf32>
    %cst = arith.constant dense<0.000000e+00> : vector<7x32xf32>
    %2 = tpu.matmul %0, %1, %cst {dimension_numbers = #tpu.dot_dimension_numbers<[1], [0], [0], [1], [0, 0, 1, 1], [], []>} : vector<7x72xf32>, vector<72x32xf32>, vector<7x32xf32> -> vector<7x32xf32>
    %c0_3 = arith.constant 0 : index
    %c0_4 = arith.constant 0 : index
    %3 = vector.load %arg2[%c0_3, %c0_4] : memref<1x32xf32, #tpu.memory_space<vmem>>, vector<1x32xf32>
    %4 = vector.broadcast %3 : vector<1x32xf32> to vector<7x32xf32>
    %5 = arith.addf %2, %4 : vector<7x32xf32>
    %cst_5 = arith.constant dense<0xFF800000> : vector<7xf32>
    %6 = vector.multi_reduction <maximumf>, %5, %cst_5 [1] : vector<7x32xf32> to vector<7xf32>
    %7 = vector.shape_cast %6 : vector<7xf32> to vector<7x1xf32>
    %8 = vector.broadcast %7 : vector<7x1xf32> to vector<7x32xf32>
    %9 = arith.subf %5, %8 : vector<7x32xf32>
    %10 = math.exp %9 : vector<7x32xf32>
    %cst_6 = arith.constant dense<0.000000e+00> : vector<7xf32>
    %11 = vector.multi_reduction <add>, %10, %cst_6 [1] : vector<7x32xf32> to vector<7xf32>
    %12 = vector.shape_cast %11 : vector<7xf32> to vector<7x1xf32>
    %13 = math.log %12 : vector<7x1xf32>
    %14 = vector.broadcast %13 : vector<7x1xf32> to vector<7x32xf32>
    %15 = arith.subf %9, %14 : vector<7x32xf32>
    %c0_7 = arith.constant 0 : index
    %c0_8 = arith.constant 0 : index
    %16 = vector.load %arg3[%c0_7, %c0_8] : memref<7x32xf32, #tpu.memory_space<vmem>>, vector<7x32xf32>
    tpu.vector_store %arg3[%c0_7, %c0_8], %15 {strides = array<i32>} : memref<7x32xf32, #tpu.memory_space<vmem>>, vector<7x32xf32>,
    return
  }
}

</mosaic_0001>

<llo_original>
// kernel: neg.3
$region0: #{neg.3}
  #allocation0 [shape = 's32[1]{0}', space=sflag, size = 0x4, scoped, tag = 'scoped memory for neg.3']
  %s0 = inlined_call_operand.vmem [shape: f32[7,32], index: 0, kind: input, shape index: {}]
  %s1 = inlined_call_operand.vmem [shape: f32[7,32], index: 1, kind: output, shape index: {}]
  %v2 = vld [vmem:[%s0] sm:$0x7f]
  %3 = xla_tuple %v2
  %4 = xla_tuple %3
  %v5 = vxor.u32 %v2, 2147483648
  %6 = xla_tuple %v5
  %7 = vst [vmem:[%s1] sm:$0xff] %v5

// kernel: forward.3
$region0: #{forward.3}
  #allocation0 [shape = 'u32[]', space=smem, size = 0x4, offset = 0x4, fixed_abs, tag = 'smem constant byte address 0x4 - core index']
  #allocation1 [shape = 'u32[72,128]{1,0:T(1,128)}', space=vmem, size = 0x9000, scoped, tag = 'internal scratch']
  %s0 = inlined_call_operand.vmem [shape: f32[7,72], index: 0, kind: input, shape index: {}]
  %s1 = inlined_call_operand.vmem [shape: f32[72,32], index: 1, kind: input, shape index: {}]
  %s2 = inlined_call_operand.vmem [shape: f32[1,32], index: 2, kind: input, shape index: {}]
  %s3 = inlined_call_operand.vmem [shape: f32[7,32], index: 3, kind: output, shape index: {}]
  %s4 = sld [smem:[#allocation0]]
  $region22: #{forward.3} parent=0
    _
  %s6 = ssub.s32 1, %s4
  %s7 = scalar_select 0, %s6, %s4
  // Predicated region
  $region2: #{forward.3} parent=0 // pred_check
    _
  $region3: #{forward.3} parent=0 // pred_check_branch
    %9 = sbr.rel (0) target = $region5
  $region4: #{forward.3} parent=0 // pred_region
    _
  $region5: #{forward.3} parent=0 // pred_fallthru
    _
  // Predicated region
  $region6: #{forward.3} parent=0 // pred_check
    _
  $region7: #{forward.3} parent=0 // pred_check_branch
    %11 = sbr.rel (0) target = $region9
  $region8: #{forward.3} parent=0 // pred_region
    _
  $region9: #{forward.3} parent=0 // pred_fallthru
    _
  // Predicated region
  $region10: #{forward.3} parent=0 // pred_check
    _
  $region11: #{forward.3} parent=0 // pred_check_branch
    %13 = sbr.rel (0) target = $region13
  $region12: #{forward.3} parent=0 // pred_region
    _
  $region13: #{forward.3} parent=0 // pred_fallthru
    _
  %v14 = vld [vmem:[%s0] sm:$0x7f]
  %v15 = vld [vmem:[%s1] sm:$0xff]
  %v16 = vld [vmem:[%s1 + $0x8] sm:$0xff]
  %v17 = vld [vmem:[%s1 + $0x10] sm:$0xff]
  %v18 = vld [vmem:[%s1 + $0x18] sm:$0xff]
  %v19 = vld [vmem:[%s1 + $0x20] sm:$0xff]
  %v20 = vld [vmem:[%s1 + $0x28] sm:$0xff]
  %v21 = vld [vmem:[%s1 + $0x30] sm:$0xff]
  %v22 = vld [vmem:[%s1 + $0x38] sm:$0xff]
  %v23 = vld [vmem:[%s1 + $0x40] sm:$0xff]
  %v24 = vld [vmem:[%s2] sm:$0x1]
  %v26 = vperm.slane %v24, 0
  %vm28 = vcmask 588800
  %v30 = vsel %vm28, %v14, 0
  %32 = vmatpush.msra.mxu0 0.0
  %33 = vmatpush.msra.mxu0 0.0
  %34 = vmatpush.msra.mxu0 0.0
  %35 = vmatpush.msra.mxu0 0.0
  %36 = vmatpush.msra.mxu0 0.0
  %37 = vmatpush.msra.mxu0 0.0
  %38 = vmatpush.msra.mxu0 0.0
  %39 = vmatpush.msra.mxu0 %v23
  %40 = vmatpush.msra.mxu0 %v22
  %41 = vmatpush.msra.mxu0 %v21
  %42 = vmatpush.msra.mxu0 %v20
  %43 = vmatpush.msra.mxu0 %v19
  %44 = vmatpush.msra.mxu0 %v18
  %45 = vmatpush.msra.mxu0 %v17
  %46 = vmatpush.msra.mxu0 %v16
  %47 = vmatpush.msra.mxu0 %v15
  %48 = vmatmul.f32.gmra.mxu0 %v30
  %v49 = vpop.f32.mrf.mxu0
  %v50 = vadd.f32 %v26, %v49
  %51 = vdwg.mxu0
  %vm52 = vcmask 260096
  %v53 = vsel %vm52, %v50, -inf
  %54 = vmax.xlane.f32.xlu0 %v53
  %v55 = vpop.xlane.xlu0 %54
  %v56 = vsub.f32 %v50, %v55
  %v57 = vmul.f32 %v56, 1.442695
  %v58 = vpow.pop %v57
  %v59 = vsel %vm52, %v58, 0.0
  %60 = vadd.xlane.f32.xlu0 %v59
  %v61 = vpop.xlane.xlu0 %60
  %v62 = vlog2.pop %v61
  %v63 = vmul.f32 %v62, 0.6931472
  %v64 = vsub.f32 %v56, %v63
  %65 = vst.msk [vmem:[%s3] sm:$0x7f] %vm52, %v64
  // Predicated region
  $region14: #{forward.3} parent=0 // pred_check
    _
  $region15: #{forward.3} parent=0 // pred_check_branch
    %67 = sbr.rel (0) target = $region17
  $region16: #{forward.3} parent=0 // pred_region
    _
  $region17: #{forward.3} parent=0 // pred_fallthru
    _
  // Predicated region
  $region18: #{forward.3} parent=0 // pred_check
    _
  $region19: #{forward.3} parent=0 // pred_check_branch
    %69 = sbr.rel (0) target = $region21
  $region20: #{forward.3} parent=0 // pred_region
    _
  $region21: #{forward.3} parent=0 // pred_fallthru
    _

// kernel: forward.2
$region0: #{forward.2}
  #allocation0 [shape = 'u32[]', space=smem, size = 0x4, offset = 0x4, fixed_abs, tag = 'smem constant byte address 0x4 - core index']
  #allocation1 [shape = 'u32[72,128]{1,0:T(1,128)}', space=vmem, size = 0x9000, scoped, tag = 'internal scratch']
  %s0 = inlined_call_operand.vmem [shape: f32[16,96], index: 0, kind: input, shape index: {}]
  %s1 = inlined_call_operand.vmem [shape: f32[16,96], index: 1, kind: input, shape index: {}]
  %s2 = inlined_call_operand.vmem [shape: f32[16,12], index: 2, kind: input, shape index: {}]
  %s3 = inlined_call_operand.vmem [shape: f32[16,1], index: 3, kind: input, shape index: {}]
  %s4 = inlined_call_operand.vmem [shape: f32[12,96], index: 4, kind: input, shape index: {}]
  %s5 = inlined_call_operand.vmem [shape: f32[1,96], index: 5, kind: input, shape index: {}]
  %s6 = inlined_call_operand.vmem [shape: f32[32,96], index: 6, kind: input, shape index: {}]
  %s7 = inlined_call_operand.vmem [shape: f32[32,96], index: 7, kind: input, shape index: {}]
  %s8 = inlined_call_operand.vmem [shape: f32[1,96], index: 8, kind: input, shape index: {}]
  %s9 = inlined_call_operand.vmem [shape: f32[1,96], index: 9, kind: input, shape index: {}]
  %s10 = inlined_call_operand.vmem [shape: f32[16,64], index: 10, kind: output, shape index: {}]
  %s11 = sld [smem:[#allocation0]]
  $region50: #{forward.2} parent=0
    _
  %s13 = ssub.s32 1, %s11
  %s14 = scalar_select 0, %s13, %s11
  // Predicated region
  $region2: #{forward.2} parent=0 // pred_check
    _
  $region3: #{forward.2} parent=0 // pred_check_branch
    %16 = sbr.rel (0) target = $region5
  $region4: #{forward.2} parent=0 // pred_region
    _
  $region5: #{forward.2} parent=0 // pred_fallthru
    _
  // Predicated region
  $region6: #{forward.2} parent=0 // pred_check
    _
  $region7: #{forward.2} parent=0 // pred_check_branch
    %18 = sbr.rel (0) target = $region9
  $region8: #{forward.2} parent=0 // pred_region
    _
  $region9: #{forward.2} parent=0 // pred_fallthru
    _
  // Predicated region
  $region10: #{forward.2} parent=0 // pred_check
    _
  $region11: #{forward.2} parent=0 // pred_check_branch
    %20 = sbr.rel (0) target = $region13
  $region12: #{forward.2} parent=0 // pred_region
    _
  $region13: #{forward.2} parent=0 // pred_fallthru
    _
  // Predicated region
  $region14: #{forward.2} parent=0 // pred_check
    _
  $region15: #{forward.2} parent=0 // pred_check_branch
    %22 = sbr.rel (0) target = $region17
  $region16: #{forward.2} parent=0 // pred_region
    _
  $region17: #{forward.2} parent=0 // pred_fallthru
    _
  // Predicated region
  $region18: #{forward.2} parent=0 // pred_check
    _
  $region19: #{forward.2} parent=0 // pred_check_branch
    %24 = sbr.rel (0) target = $region21
  $region20: #{forward.2} parent=0 // pred_region
    _
  $region21: #{forward.2} parent=0 // pred_fallthru
    _
  // Predicated region
  $region22: #{forward.2} parent=0 // pred_check
    _
  $region23: #{forward.2} parent=0 // pred_check_branch
    %26 = sbr.rel (0) target = $region25
  $region24: #{forward.2} parent=0 // pred_region
    _
  $region25: #{forward.2} parent=0 // pred_fallthru
    _
  // Predicated region
  $region26: #{forward.2} parent=0 // pred_check
    _
  $region27: #{forward.2} parent=0 // pred_check_branch
    %28 = sbr.rel (0) target = $region29
  $region28: #{forward.2} parent=0 // pred_region
    _
  $region29: #{forward.2} parent=0 // pred_fallthru
    _
  // Predicated region
  $region30: #{forward.2} parent=0 // pred_check
    _
  $region31: #{forward.2} parent=0 // pred_check_branch
    %30 = sbr.rel (0) target = $region33
  $region32: #{forward.2} parent=0 // pred_region
    _
  $region33: #{forward.2} parent=0 // pred_fallthru
    _
  // Predicated region
  $region34: #{forward.2} parent=0 // pred_check
    _
  $region35: #{forward.2} parent=0 // pred_check_branch
    %32 = sbr.rel (0) target = $region37
  $region36: #{forward.2} parent=0 // pred_region
    _
  $region37: #{forward.2} parent=0 // pred_fallthru
    _
  // Predicated region
  $region38: #{forward.2} parent=0 // pred_check
    _
  $region39: #{forward.2} parent=0 // pred_check_branch
    %34 = sbr.rel (0) target = $region41
  $region40: #{forward.2} parent=0 // pred_region
    _
  $region41: #{forward.2} parent=0 // pred_fallthru
    _
  %v35 = vld [vmem:[%s0] sm:$0xff]
  %v36 = vld [vmem:[%s0 + $0x8] sm:$0xff]
  %v37 = vld [vmem:[%s2] sm:$0xff]
  %v38 = vld [vmem:[%s2 + $0x8] sm:$0xff]
  %v39 = vld [vmem:[%s4] sm:$0xff]
  %v40 = vld [vmem:[%s4 + $0x8] sm:$0xf]
  %vm41 = vcmask 97280
  %v43 = vsel %vm41, %v37, 0
  %v46 = vsel %vm41, %v38, 0
  %vm48 = vcmask 1043456
  %v50 = vsel %vm48, %v40, 0
  %52 = vmatpush.msra.mxu0 0.0
  %53 = vmatpush.msra.mxu0 0.0
  %54 = vmatpush.msra.mxu0 0.0
  %55 = vmatpush.msra.mxu0 0.0
  %56 = vmatpush.msra.mxu0 0.0
  %57 = vmatpush.msra.mxu0 0.0
  %58 = vmatpush.msra.mxu0 0.0
  %59 = vmatpush.msra.mxu0 0.0
  %60 = vmatpush.msra.mxu0 0.0
  %61 = vmatpush.msra.mxu0 0.0
  %62 = vmatpush.msra.mxu0 0.0
  %63 = vmatpush.msra.mxu0 0.0
  %64 = vmatpush.msra.mxu0 0.0
  %65 = vmatpush.msra.mxu0 0.0
  %66 = vmatpush.msra.mxu0 %v50
  %67 = vmatpush.msra.mxu0 %v39
  %68 = vmatmul.f32.gmra.mxu0 %v43
  %v69 = vpop.f32.mrf.mxu0
  %v70 = vadd.f32 0.0, %v69
  %71 = vmatmul.f32.gmra.mxu0 %v46
  %v72 = vpop.f32.mrf.mxu0
  %v73 = vadd.f32 0.0, %v72
  %74 = vdwg.mxu0
  %v75 = vadd.f32 %v35, %v70
  %v76 = vadd.f32 %v36, %v73
  %v77 = vld [vmem:[%s1] sm:$0xff]
  %v78 = vld [vmem:[%s1 + $0x8] sm:$0xff]
  %v79 = vld [vmem:[%s3] sm:$0xff]
  %v80 = vld [vmem:[%s3 + $0x8] sm:$0xff]
  %v81 = vld [vmem:[%s5] sm:$0x1]
  %83 = vset.pattern.permute.xlu0 0
  %84 = vperm.xlu0 %83, %v79
  %v85 = vpop.permute.xlu0 %84
  %88 = vset.pattern.permute.xlu0 0
  %89 = vperm.xlu0 %88, %v80
  %v90 = vpop.permute.xlu0 %89
  %v93 = vperm.slane %v81, 0
  %v95 = vmul.f32 %v85, %v93
  %v96 = vmul.f32 %v90, %v93
  %v97 = vadd.f32 %v77, %v95
  %v98 = vadd.f32 %v78, %v96
  %v99 = vld [vmem:[%s6] sm:$0xff]
  %v100 = vld [vmem:[%s6 + $0x8] sm:$0xff]
  %v101 = vld [vmem:[%s6 + $0x10] sm:$0xff]
  %v102 = vld [vmem:[%s6 + $0x18] sm:$0xff]
  %v103 = vld [vmem:[%s7] sm:$0xff]
  %v104 = vld [vmem:[%s7 + $0x8] sm:$0xff]
  %v105 = vld [vmem:[%s7 + $0x10] sm:$0xff]
  %v106 = vld [vmem:[%s7 + $0x18] sm:$0xff]
  %v107 = vld [vmem:[%s8] sm:$0x1]
  %v108 = vld [vmem:[%s9] sm:$0x1]
  %v110 = vperm.slane %v107, 0
  %vm112 = vcmask 261120
  %v114 = vsel %vm112, 0.0, 0
  %116 = vmatpush.msra.mxu0 0.0
  %117 = vmatpush.msra.mxu0 0.0
  %118 = vmatpush.msra.mxu0 0.0
  %119 = vmatpush.msra.mxu0 0.0
  %120 = vmatpush.msra.mxu0 0.0
  %121 = vmatpush.msra.mxu0 0.0
  %122 = vmatpush.msra.mxu0 0.0
  %123 = vmatpush.msra.mxu0 0.0
  %124 = vmatpush.msra.mxu0 0.0
  %125 = vmatpush.msra.mxu0 0.0
  %126 = vmatpush.msra.mxu0 0.0
  %127 = vmatpush.msra.mxu0 0.0
  %128 = vmatpush.msra.mxu0 %v102
  %129 = vmatpush.msra.mxu0 %v101
  %130 = vmatpush.msra.mxu0 %v100
  %131 = vmatpush.msra.mxu0 %v99
  %132 = vmatmul.f32.gmra.mxu0 %v114
  %v133 = vpop.f32.mrf.mxu0
  %v134 = vadd.f32 %v110, %v133
  %135 = vdwg.mxu0
  %v137 = vperm.slane %v108, 0
  %139 = vmatpush.msra.mxu0 0.0
  %140 = vmatpush.msra.mxu0 0.0
  %141 = vmatpush.msra.mxu0 0.0
  %142 = vmatpush.msra.mxu0 0.0
  %143 = vmatpush.msra.mxu0 0.0
  %144 = vmatpush.msra.mxu0 0.0
  %145 = vmatpush.msra.mxu0 0.0
  %146 = vmatpush.msra.mxu0 0.0
  %147 = vmatpush.msra.mxu0 0.0
  %148 = vmatpush.msra.mxu0 0.0
  %149 = vmatpush.msra.mxu0 0.0
  %150 = vmatpush.msra.mxu0 0.0
  %151 = vmatpush.msra.mxu0 %v106
  %152 = vmatpush.msra.mxu0 %v105
  %153 = vmatpush.msra.mxu0 %v104
  %154 = vmatpush.msra.mxu0 %v103
  %155 = vmatmul.f32.gmra.mxu0 %v114
  %v156 = vpop.f32.mrf.mxu0
  %v157 = vadd.f32 %v137, %v156
  %158 = vdwg.mxu0
  %v159 = vadd.f32 %v75, %v134
  %v160 = vxor.u32 %v159, 2147483648
  %v161 = vmul.f32 %v160, 1.442695
  %v162 = vpow.pop %v161
  %v163 = vadd.f32 %v162, 1.0
  %v164 = vrcp.pop %v163
  %v165 = vmul.f32 %v163, %v164
  %v166 = vsub.f32 1.0, %v165
  %v167 = vmul.f32 %v164, %v166
  %v168 = vadd.f32 %v164, %v167
  %vm169 = vweird.f32 %v163
  %vm170 = vweird.f32 %v164
  %vm171 = vmor %vm169, %vm170
  %v172 = vsel %vm171, %v164, %v168
  %v173 = vand.u32 2147483647, %v163
  %vm174 = vcmp.eq.f32.partialorder %v173, 8.507059e+37
  %v175 = vand.u32 %v163, 2147483648
  %v176 = vor.u32 1.1754944e-38, %v175
  %v177 = vsel %vm174, %v176, %v172
  %v178 = vmul.f32 1.0, %v177
  %v179 = vadd.f32 %v97, %v157
  %v180 = vxor.u32 %v179, 2147483648
  %v181 = vmul.f32 %v180, 1.442695
  %v182 = vpow.pop %v181
  %v183 = vadd.f32 %v182, 1.0
  %v184 = vrcp.pop %v183
  %v185 = vmul.f32 %v183, %v184
  %v186 = vsub.f32 1.0, %v185
  %v187 = vmul.f32 %v184, %v186
  %v188 = vadd.f32 %v184, %v187
  %vm189 = vweird.f32 %v183
  %vm190 = vweird.f32 %v184
  %vm191 = vmor %vm189, %vm190
  %v192 = vsel %vm191, %v184, %v188
  %v193 = vand.u32 2147483647, %v183
  %vm194 = vcmp.eq.f32.partialorder %v193, 8.507059e+37
  %v195 = vand.u32 %v183, 2147483648
  %v196 = vor.u32 1.1754944e-38, %v195
  %v197 = vsel %vm194, %v196, %v192
  %v198 = vmul.f32 1.0, %v197
  %200 = vrot.lane.b32.xlu0 %v134, 64
  %v201 = vpop.permute.xlu0 %200
  %v203 = vmul.f32 %v178, %v201
  %205 = vrot.lane.b32.xlu0 %v203, 64
  %v206 = vpop.permute.xlu0 %205
  %v208 = vadd.f32 %v75, %v206
  %v209 = vtanh.pop %v208
  %211 = vrot.lane.b32.xlu0 %v157, 64
  %v212 = vpop.permute.xlu0 %211
  %v214 = vmul.f32 %v198, %v212
  %216 = vrot.lane.b32.xlu0 %v214, 64
  %v217 = vpop.permute.xlu0 %216
  %v219 = vadd.f32 %v97, %v217
  %v220 = vtanh.pop %v219
  %v221 = vsub.f32 1.0, %v178
  %223 = vrot.lane.b32.xlu0 %v209, 96
  %v224 = vpop.permute.xlu0 %223
  %v226 = vmul.f32 %v221, %v224
  %v227 = vmul.f32 %v178, 0.0
  %v228 = vadd.f32 %v226, %v227
  %v229 = vsub.f32 1.0, %v198
  %231 = vrot.lane.b32.xlu0 %v220, 96
  %v232 = vpop.permute.xlu0 %231
  %v234 = vmul.f32 %v229, %v232
  %v235 = vmul.f32 %v198, 0.0
  %v236 = vadd.f32 %v234, %v235
  %238 = vrot.lane.b32.xlu0 %v228, 96
  %v239 = vpop.permute.xlu0 %238
  %vm241 = vcmask 254976
  %242 = vst.msk [vmem:[%s10] sm:$0x3] %vm241, %v239
  %vm243 = vcmask 517376
  %244 = vst.msk [vmem:[%s10] sm:$0x3] %vm243, %v236
  %v245 = vsel %vm112, %v239, 0
  %247 = vmatpush.msra.mxu0 0.0
  %248 = vmatpush.msra.mxu0 0.0
  %249 = vmatpush.msra.mxu0 0.0
  %250 = vmatpush.msra.mxu0 0.0
  %251 = vmatpush.msra.mxu0 0.0
  %252 = vmatpush.msra.mxu0 0.0
  %253 = vmatpush.msra.mxu0 0.0
  %254 = vmatpush.msra.mxu0 0.0
  %255 = vmatpush.msra.mxu0 0.0
  %256 = vmatpush.msra.mxu0 0.0
  %257 = vmatpush.msra.mxu0 0.0
  %258 = vmatpush.msra.mxu0 0.0
  %259 = vmatpush.msra.mxu0 %v102
  %260 = vmatpush.msra.mxu0 %v101
  %261 = vmatpush.msra.mxu0 %v100
  %262 = vmatpush.msra.mxu0 %v99
  %263 = vmatmul.f32.gmra.mxu0 %v245
  %v264 = vpop.f32.mrf.mxu0
  %v265 = vadd.f32 %v110, %v264
  %266 = vdwg.mxu0
  %268 = vrot.lane.b32.xlu0 %v236, 96
  %v269 = vpop.permute.xlu0 %268
  %v270 = vsel %vm112, %v269, 0
  %272 = vmatpush.msra.mxu0 0.0
  %273 = vmatpush.msra.mxu0 0.0
  %274 = vmatpush.msra.mxu0 0.0
  %275 = vmatpush.msra.mxu0 0.0
  %276 = vmatpush.msra.mxu0 0.0
  %277 = vmatpush.msra.mxu0 0.0
  %278 = vmatpush.msra.mxu0 0.0
  %279 = vmatpush.msra.mxu0 0.0
  %280 = vmatpush.msra.mxu0 0.0
  %281 = vmatpush.msra.mxu0 0.0
  %282 = vmatpush.msra.mxu0 0.0
  %283 = vmatpush.msra.mxu0 0.0
  %284 = vmatpush.msra.mxu0 %v106
  %285 = vmatpush.msra.mxu0 %v105
  %286 = vmatpush.msra.mxu0 %v104
  %287 = vmatpush.msra.mxu0 %v103
  %288 = vmatmul.f32.gmra.mxu0 %v270
  %v289 = vpop.f32.mrf.mxu0
  %v290 = vadd.f32 %v137, %v289
  %291 = vdwg.mxu0
  %v293 = vrot.slane %v265, 6
  %v295 = vadd.f32 %v75, %v293
  %v296 = vxor.u32 %v295, 2147483648
  %v297 = vmul.f32 %v296, 1.442695
  %v298 = vpow.pop %v297
  %v299 = vadd.f32 %v298, 1.0
  %v300 = vrcp.pop %v299
  %v301 = vmul.f32 %v299, %v300
  %v302 = vsub.f32 1.0, %v301
  %v303 = vmul.f32 %v300, %v302
  %v304 = vadd.f32 %v300, %v303
  %vm305 = vweird.f32 %v299
  %vm306 = vweird.f32 %v300
  %vm307 = vmor %vm305, %vm306
  %v308 = vsel %vm307, %v300, %v304
  %v309 = vand.u32 2147483647, %v299
  %vm310 = vcmp.eq.f32.partialorder %v309, 8.507059e+37
  %v311 = vand.u32 %v299, 2147483648
  %v312 = vor.u32 1.1754944e-38, %v311
  %v313 = vsel %vm310, %v312, %v308
  %v314 = vmul.f32 1.0, %v313
  %v316 = vrot.slane %v290, 6
  %v318 = vadd.f32 %v97, %v316
  %v319 = vxor.u32 %v318, 2147483648
  %v320 = vmul.f32 %v319, 1.442695
  %v321 = vpow.pop %v320
  %v322 = vadd.f32 %v321, 1.0
  %v323 = vrcp.pop %v322
  %v324 = vmul.f32 %v322, %v323
  %v325 = vsub.f32 1.0, %v324
  %v326 = vmul.f32 %v323, %v325
  %v327 = vadd.f32 %v323, %v326
  %vm328 = vweird.f32 %v322
  %vm329 = vweird.f32 %v323
  %vm330 = vmor %vm328, %vm329
  %v331 = vsel %vm330, %v323, %v327
  %v332 = vand.u32 2147483647, %v322
  %vm333 = vcmp.eq.f32.partialorder %v332, 8.507059e+37
  %v334 = vand.u32 %v322, 2147483648
  %v335 = vor.u32 1.1754944e-38, %v334
  %v336 = vsel %vm333, %v335, %v331
  %v337 = vmul.f32 1.0, %v336
  %338 = vrot.lane.b32.xlu0 %v293, 64
  %v339 = vpop.permute.xlu0 %338
  %v341 = vmul.f32 %v314, %v339
  %343 = vrot.lane.b32.xlu0 %v341, 64
  %v344 = vpop.permute.xlu0 %343
  %v346 = vadd.f32 %v75, %v344
  %v347 = vtanh.pop %v346
  %348 = vrot.lane.b32.xlu0 %v316, 64
  %v349 = vpop.permute.xlu0 %348
  %v351 = vmul.f32 %v337, %v349
  %353 = vrot.lane.b32.xlu0 %v351, 64
  %v354 = vpop.permute.xlu0 %353
  %v356 = vadd.f32 %v97, %v354
  %v357 = vtanh.pop %v356
  %v358 = vsub.f32 1.0, %v314
  %360 = vrot.lane.b32.xlu0 %v347, 96
  %v361 = vpop.permute.xlu0 %360
  %v363 = vmul.f32 %v358, %v361
  %v364 = vrot.slane %v228, 6
  %v366 = vmul.f32 %v314, %v364
  %v367 = vadd.f32 %v363, %v366
  %v368 = vsub.f32 1.0, %v337
  %370 = vrot.lane.b32.xlu0 %v357, 96
  %v371 = vpop.permute.xlu0 %370
  %v373 = vmul.f32 %v368, %v371
  %v374 = vrot.slane %v236, 6
  %v376 = vmul.f32 %v337, %v374
  %v377 = vadd.f32 %v373, %v376
  %379 = vrot.lane.b32.xlu0 %v367, 96
  %v380 = vpop.permute.xlu0 %379
  %vm382 = vcmask 257026
  %383 = vst.msk [vmem:[%s10] sm:$0xc] %vm382, %v380
  %vm384 = vcmask 519426
  %385 = vst.msk [vmem:[%s10] sm:$0xc] %vm384, %v377
  %v386 = vrot.slane %v367, 2
  %387 = vrot.lane.b32.xlu0 %v386, 96
  %v388 = vpop.permute.xlu0 %387
  %v389 = vsel %vm112, %v388, 0
  %391 = vmatpush.msra.mxu0 0.0
  %392 = vmatpush.msra.mxu0 0.0
  %393 = vmatpush.msra.mxu0 0.0
  %394 = vmatpush.msra.mxu0 0.0
  %395 = vmatpush.msra.mxu0 0.0
  %396 = vmatpush.msra.mxu0 0.0
  %397 = vmatpush.msra.mxu0 0.0
  %398 = vmatpush.msra.mxu0 0.0
  %399 = vmatpush.msra.mxu0 0.0
  %400 = vmatpush.msra.mxu0 0.0
  %401 = vmatpush.msra.mxu0 0.0
  %402 = vmatpush.msra.mxu0 0.0
  %403 = vmatpush.msra.mxu0 %v102
  %404 = vmatpush.msra.mxu0 %v101
  %405 = vmatpush.msra.mxu0 %v100
  %406 = vmatpush.msra.mxu0 %v99
  %407 = vmatmul.f32.gmra.mxu0 %v389
  %v408 = vpop.f32.mrf.mxu0
  %v409 = vadd.f32 %v110, %v408
  %410 = vdwg.mxu0
  %v412 = vrot.slane %v377, 2
  %413 = vrot.lane.b32.xlu0 %v412, 96
  %v414 = vpop.permute.xlu0 %413
  %v415 = vsel %vm112, %v414, 0
  %417 = vmatpush.msra.mxu0 0.0
  %418 = vmatpush.msra.mxu0 0.0
  %419 = vmatpush.msra.mxu0 0.0
  %420 = vmatpush.msra.mxu0 0.0
  %421 = vmatpush.msra.mxu0 0.0
  %422 = vmatpush.msra.mxu0 0.0
  %423 = vmatpush.msra.mxu0 0.0
  %424 = vmatpush.msra.mxu0 0.0
  %425 = vmatpush.msra.mxu0 0.0
  %426 = vmatpush.msra.mxu0 0.0
  %427 = vmatpush.msra.mxu0 0.0
  %428 = vmatpush.msra.mxu0 0.0
  %429 = vmatpush.msra.mxu0 %v106
  %430 = vmatpush.msra.mxu0 %v105
  %431 = vmatpush.msra.mxu0 %v104
  %432 = vmatpush.msra.mxu0 %v103
  %433 = vmatmul.f32.gmra.mxu0 %v415
  %v434 = vpop.f32.mrf.mxu0
  %v435 = vadd.f32 %v137, %v434
  %436 = vdwg.mxu0
  %v438 = vrot.slane %v409, 4
  %v440 = vadd.f32 %v75, %v438
  %v441 = vxor.u32 %v440, 2147483648
  %v442 = vmul.f32 %v441, 1.442695
  %v443 = vpow.pop %v442
  %v444 = vadd.f32 %v443, 1.0
  %v445 = vrcp.pop %v444
  %v446 = vmul.f32 %v444, %v445
  %v447 = vsub.f32 1.0, %v446
  %v448 = vmul.f32 %v445, %v447
  %v449 = vadd.f32 %v445, %v448
  %vm450 = vweird.f32 %v444
  %vm451 = vweird.f32 %v445
  %vm452 = vmor %vm450, %vm451
  %v453 = vsel %vm452, %v445, %v449
  %v454 = vand.u32 2147483647, %v444
  %vm455 = vcmp.eq.f32.partialorder %v454, 8.507059e+37
  %v456 = vand.u32 %v444, 2147483648
  %v457 = vor.u32 1.1754944e-38, %v456
  %v458 = vsel %vm455, %v457, %v453
  %v459 = vmul.f32 1.0, %v458
  %v461 = vrot.slane %v435, 4
  %v463 = vadd.f32 %v97, %v461
  %v464 = vxor.u32 %v463, 2147483648
  %v465 = vmul.f32 %v464, 1.442695
  %v466 = vpow.pop %v465
  %v467 = vadd.f32 %v466, 1.0
  %v468 = vrcp.pop %v467
  %v469 = vmul.f32 %v467, %v468
  %v470 = vsub.f32 1.0, %v469
  %v471 = vmul.f32 %v468, %v470
  %v472 = vadd.f32 %v468, %v471
  %vm473 = vweird.f32 %v467
  %vm474 = vweird.f32 %v468
  %vm475 = vmor %vm473, %vm474
  %v476 = vsel %vm475, %v468, %v472
  %v477 = vand.u32 2147483647, %v467
  %vm478 = vcmp.eq.f32.partialorder %v477, 8.507059e+37
  %v479 = vand.u32 %v467, 2147483648
  %v480 = vor.u32 1.1754944e-38, %v479
  %v481 = vsel %vm478, %v480, %v476
  %v482 = vmul.f32 1.0, %v481
  %483 = vrot.lane.b32.xlu0 %v438, 64
  %v484 = vpop.permute.xlu0 %483
  %v486 = vmul.f32 %v459, %v484
  %488 = vrot.lane.b32.xlu0 %v486, 64
  %v489 = vpop.permute.xlu0 %488
  %v491 = vadd.f32 %v75, %v489
  %v492 = vtanh.pop %v491
  %493 = vrot.lane.b32.xlu0 %v461, 64
  %v494 = vpop.permute.xlu0 %493
  %v496 = vmul.f32 %v482, %v494
  %498 = vrot.lane.b32.xlu0 %v496, 64
  %v499 = vpop.permute.xlu0 %498
  %v501 = vadd.f32 %v97, %v499
  %v502 = vtanh.pop %v501
  %v503 = vsub.f32 1.0, %v459
  %505 = vrot.lane.b32.xlu0 %v492, 96
  %v506 = vpop.permute.xlu0 %505
  %v508 = vmul.f32 %v503, %v506
  %v509 = vrot.slane %v367, 6
  %v511 = vmul.f32 %v459, %v509
  %v512 = vadd.f32 %v508, %v511
  %v513 = vsub.f32 1.0, %v482
  %515 = vrot.lane.b32.xlu0 %v502, 96
  %v516 = vpop.permute.xlu0 %515
  %v518 = vmul.f32 %v513, %v516
  %v519 = vrot.slane %v377, 6
  %v521 = vmul.f32 %v482, %v519
  %v522 = vadd.f32 %v518, %v521
  %524 = vrot.lane.b32.xlu0 %v512, 96
  %v525 = vpop.permute.xlu0 %524
  %vm527 = vcmask 259076
  %528 = vst.msk [vmem:[%s10] sm:$0x30] %vm527, %v525
  %vm529 = vcmask 521476
  %530 = vst.msk [vmem:[%s10] sm:$0x30] %vm529, %v522
  %v531 = vrot.slane %v512, 4
  %532 = vrot.lane.b32.xlu0 %v531, 96
  %v533 = vpop.permute.xlu0 %532
  %v534 = vsel %vm112, %v533, 0
  %536 = vmatpush.msra.mxu0 0.0
  %537 = vmatpush.msra.mxu0 0.0
  %538 = vmatpush.msra.mxu0 0.0
  %539 = vmatpush.msra.mxu0 0.0
  %540 = vmatpush.msra.mxu0 0.0
  %541 = vmatpush.msra.mxu0 0.0
  %542 = vmatpush.msra.mxu0 0.0
  %543 = vmatpush.msra.mxu0 0.0
  %544 = vmatpush.msra.mxu0 0.0
  %545 = vmatpush.msra.mxu0 0.0
  %546 = vmatpush.msra.mxu0 0.0
  %547 = vmatpush.msra.mxu0 0.0
  %548 = vmatpush.msra.mxu0 %v102
  %549 = vmatpush.msra.mxu0 %v101
  %550 = vmatpush.msra.mxu0 %v100
  %551 = vmatpush.msra.mxu0 %v99
  %552 = vmatmul.f32.gmra.mxu0 %v534
  %v553 = vpop.f32.mrf.mxu0
  %v554 = vadd.f32 %v110, %v553
  %555 = vdwg.mxu0
  %v557 = vrot.slane %v522, 4
  %558 = vrot.lane.b32.xlu0 %v557, 96
  %v559 = vpop.permute.xlu0 %558
  %v560 = vsel %vm112, %v559, 0
  %562 = vmatpush.msra.mxu0 0.0
  %563 = vmatpush.msra.mxu0 0.0
  %564 = vmatpush.msra.mxu0 0.0
  %565 = vmatpush.msra.mxu0 0.0
  %566 = vmatpush.msra.mxu0 0.0
  %567 = vmatpush.msra.mxu0 0.0
  %568 = vmatpush.msra.mxu0 0.0
  %569 = vmatpush.msra.mxu0 0.0
  %570 = vmatpush.msra.mxu0 0.0
  %571 = vmatpush.msra.mxu0 0.0
  %572 = vmatpush.msra.mxu0 0.0
  %573 = vmatpush.msra.mxu0 0.0
  %574 = vmatpush.msra.mxu0 %v106
  %575 = vmatpush.msra.mxu0 %v105
  %576 = vmatpush.msra.mxu0 %v104
  %577 = vmatpush.msra.mxu0 %v103
  %578 = vmatmul.f32.gmra.mxu0 %v560
  %v579 = vpop.f32.mrf.mxu0
  %v580 = vadd.f32 %v137, %v579
  %581 = vdwg.mxu0
  %v583 = vrot.slane %v554, 2
  %v585 = vadd.f32 %v75, %v583
  %v586 = vxor.u32 %v585, 2147483648
  %v587 = vmul.f32 %v586, 1.442695
  %v588 = vpow.pop %v587
  %v589 = vadd.f32 %v588, 1.0
  %v590 = vrcp.pop %v589
  %v591 = vmul.f32 %v589, %v590
  %v592 = vsub.f32 1.0, %v591
  %v593 = vmul.f32 %v590, %v592
  %v594 = vadd.f32 %v590, %v593
  %vm595 = vweird.f32 %v589
  %vm596 = vweird.f32 %v590
  %vm597 = vmor %vm595, %vm596
  %v598 = vsel %vm597, %v590, %v594
  %v599 = vand.u32 2147483647, %v589
  %vm600 = vcmp.eq.f32.partialorder %v599, 8.507059e+37
  %v601 = vand.u32 %v589, 2147483648
  %v602 = vor.u32 1.1754944e-38, %v601
  %v603 = vsel %vm600, %v602, %v598
  %v604 = vmul.f32 1.0, %v603
  %v606 = vrot.slane %v580, 2
  %v608 = vadd.f32 %v97, %v606
  %v609 = vxor.u32 %v608, 2147483648
  %v610 = vmul.f32 %v609, 1.442695
  %v611 = vpow.pop %v610
  %v612 = vadd.f32 %v611, 1.0
  %v613 = vrcp.pop %v612
  %v614 = vmul.f32 %v612, %v613
  %v615 = vsub.f32 1.0, %v614
  %v616 = vmul.f32 %v613, %v615
  %v617 = vadd.f32 %v613, %v616
  %vm618 = vweird.f32 %v612
  %vm619 = vweird.f32 %v613
  %vm620 = vmor %vm618, %vm619
  %v621 = vsel %vm620, %v613, %v617
  %v622 = vand.u32 2147483647, %v612
  %vm623 = vcmp.eq.f32.partialorder %v622, 8.507059e+37
  %v624 = vand.u32 %v612, 2147483648
  %v625 = vor.u32 1.1754944e-38, %v624
  %v626 = vsel %vm623, %v625, %v621
  %v627 = vmul.f32 1.0, %v626
  %628 = vrot.lane.b32.xlu0 %v583, 64
  %v629 = vpop.permute.xlu0 %628
  %v631 = vmul.f32 %v604, %v629
  %633 = vrot.lane.b32.xlu0 %v631, 64
  %v634 = vpop.permute.xlu0 %633
  %v636 = vadd.f32 %v75, %v634
  %v637 = vtanh.pop %v636
  %638 = vrot.lane.b32.xlu0 %v606, 64
  %v639 = vpop.permute.xlu0 %638
  %v641 = vmul.f32 %v627, %v639
  %643 = vrot.lane.b32.xlu0 %v641, 64
  %v644 = vpop.permute.xlu0 %643
  %v646 = vadd.f32 %v97, %v644
  %v647 = vtanh.pop %v646
  %v648 = vsub.f32 1.0, %v604
  %650 = vrot.lane.b32.xlu0 %v637, 96
  %v651 = vpop.permute.xlu0 %650
  %v653 = vmul.f32 %v648, %v651
  %v654 = vrot.slane %v512, 6
  %v656 = vmul.f32 %v604, %v654
  %v657 = vadd.f32 %v653, %v656
  %v658 = vsub.f32 1.0, %v627
  %660 = vrot.lane.b32.xlu0 %v647, 96
  %v661 = vpop.permute.xlu0 %660
  %v663 = vmul.f32 %v658, %v661
  %v664 = vrot.slane %v522, 6
  %v666 = vmul.f32 %v627, %v664
  %v667 = vadd.f32 %v663, %v666
  %669 = vrot.lane.b32.xlu0 %v657, 96
  %v670 = vpop.permute.xlu0 %669
  %vm672 = vcmask 261126
  %673 = vst.msk [vmem:[%s10] sm:$0xc0] %vm672, %v670
  %vm674 = vcmask 523526
  %675 = vst.msk [vmem:[%s10] sm:$0xc0] %vm674, %v667
  %v676 = vrot.slane %v657, 6
  %677 = vrot.lane.b32.xlu0 %v676, 96
  %v678 = vpop.permute.xlu0 %677
  %v679 = vsel %vm112, %v678, 0
  %681 = vmatpush.msra.mxu0 0.0
  %682 = vmatpush.msra.mxu0 0.0
  %683 = vmatpush.msra.mxu0 0.0
  %684 = vmatpush.msra.mxu0 0.0
  %685 = vmatpush.msra.mxu0 0.0
  %686 = vmatpush.msra.mxu0 0.0
  %687 = vmatpush.msra.mxu0 0.0
  %688 = vmatpush.msra.mxu0 0.0
  %689 = vmatpush.msra.mxu0 0.0
  %690 = vmatpush.msra.mxu0 0.0
  %691 = vmatpush.msra.mxu0 0.0
  %692 = vmatpush.msra.mxu0 0.0
  %693 = vmatpush.msra.mxu0 %v102
  %694 = vmatpush.msra.mxu0 %v101
  %695 = vmatpush.msra.mxu0 %v100
  %696 = vmatpush.msra.mxu0 %v99
  %697 = vmatmul.f32.gmra.mxu0 %v679
  %v698 = vpop.f32.mrf.mxu0
  %v699 = vadd.f32 %v110, %v698
  %700 = vdwg.mxu0
  %v702 = vrot.slane %v667, 6
  %703 = vrot.lane.b32.xlu0 %v702, 96
  %v704 = vpop.permute.xlu0 %703
  %v705 = vsel %vm112, %v704, 0
  %707 = vmatpush.msra.mxu0 0.0
  %708 = vmatpush.msra.mxu0 0.0
  %709 = vmatpush.msra.mxu0 0.0
  %710 = vmatpush.msra.mxu0 0.0
  %711 = vmatpush.msra.mxu0 0.0
  %712 = vmatpush.msra.mxu0 0.0
  %713 = vmatpush.msra.mxu0 0.0
  %714 = vmatpush.msra.mxu0 0.0
  %715 = vmatpush.msra.mxu0 0.0
  %716 = vmatpush.msra.mxu0 0.0
  %717 = vmatpush.msra.mxu0 0.0
  %718 = vmatpush.msra.mxu0 0.0
  %719 = vmatpush.msra.mxu0 %v106
  %720 = vmatpush.msra.mxu0 %v105
  %721 = vmatpush.msra.mxu0 %v104
  %722 = vmatpush.msra.mxu0 %v103
  %723 = vmatmul.f32.gmra.mxu0 %v705
  %v724 = vpop.f32.mrf.mxu0
  %v725 = vadd.f32 %v137, %v724
  %726 = vdwg.mxu0
  %v727 = vadd.f32 %v76, %v699
  %v728 = vxor.u32 %v727, 2147483648
  %v729 = vmul.f32 %v728, 1.442695
  %v730 = vpow.pop %v729
  %v731 = vadd.f32 %v730, 1.0
  %v732 = vrcp.pop %v731
  %v733 = vmul.f32 %v731, %v732
  %v734 = vsub.f32 1.0, %v733
  %v735 = vmul.f32 %v732, %v734
  %v736 = vadd.f32 %v732, %v735
  %vm737 = vweird.f32 %v731
  %vm738 = vweird.f32 %v732
  %vm739 = vmor %vm737, %vm738
  %v740 = vsel %vm739, %v732, %v736
  %v741 = vand.u32 2147483647, %v731
  %vm742 = vcmp.eq.f32.partialorder %v741, 8.507059e+37
  %v743 = vand.u32 %v731, 2147483648
  %v744 = vor.u32 1.1754944e-38, %v743
  %v745 = vsel %vm742, %v744, %v740
  %v746 = vmul.f32 1.0, %v745
  %v747 = vadd.f32 %v98, %v725
  %v748 = vxor.u32 %v747, 2147483648
  %v749 = vmul.f32 %v748, 1.442695
  %v750 = vpow.pop %v749
  %v751 = vadd.f32 %v750, 1.0
  %v752 = vrcp.pop %v751
  %v753 = vmul.f32 %v751, %v752
  %v754 = vsub.f32 1.0, %v753
  %v755 = vmul.f32 %v752, %v754
  %v756 = vadd.f32 %v752, %v755
  %vm757 = vweird.f32 %v751
  %vm758 = vweird.f32 %v752
  %vm759 = vmor %vm757, %vm758
  %v760 = vsel %vm759, %v752, %v756
  %v761 = vand.u32 2147483647, %v751
  %vm762 = vcmp.eq.f32.partialorder %v761, 8.507059e+37
  %v763 = vand.u32 %v751, 2147483648
  %v764 = vor.u32 1.1754944e-38, %v763
  %v765 = vsel %vm762, %v764, %v760
  %v766 = vmul.f32 1.0, %v765
  %768 = vrot.lane.b32.xlu0 %v699, 64
  %v769 = vpop.permute.xlu0 %768
  %v771 = vmul.f32 %v746, %v769
  %773 = vrot.lane.b32.xlu0 %v771, 64
  %v774 = vpop.permute.xlu0 %773
  %v776 = vadd.f32 %v76, %v774
  %v777 = vtanh.pop %v776
  %779 = vrot.lane.b32.xlu0 %v725, 64
  %v780 = vpop.permute.xlu0 %779
  %v782 = vmul.f32 %v766, %v780
  %784 = vrot.lane.b32.xlu0 %v782, 64
  %v785 = vpop.permute.xlu0 %784
  %v787 = vadd.f32 %v98, %v785
  %v788 = vtanh.pop %v787
  %v789 = vsub.f32 1.0, %v746
  %791 = vrot.lane.b32.xlu0 %v777, 96
  %v792 = vpop.permute.xlu0 %791
  %v794 = vmul.f32 %v789, %v792
  %v796 = vmul.f32 %v746, %v676
  %v797 = vadd.f32 %v794, %v796
  %v798 = vsub.f32 1.0, %v766
  %800 = vrot.lane.b32.xlu0 %v788, 96
  %v801 = vpop.permute.xlu0 %800
  %v803 = vmul.f32 %v798, %v801
  %v805 = vmul.f32 %v766, %v702
  %v806 = vadd.f32 %v803, %v805
  %808 = vrot.lane.b32.xlu0 %v797, 96
  %v809 = vpop.permute.xlu0 %808
  %811 = vst.msk [vmem:[%s10 + $0x8] sm:$0x3] %vm241, %v809
  %812 = vst.msk [vmem:[%s10 + $0x8] sm:$0x3] %vm243, %v806
  %v813 = vsel %vm112, %v809, 0
  %815 = vmatpush.msra.mxu0 0.0
  %816 = vmatpush.msra.mxu0 0.0
  %817 = vmatpush.msra.mxu0 0.0
  %818 = vmatpush.msra.mxu0 0.0
  %819 = vmatpush.msra.mxu0 0.0
  %820 = vmatpush.msra.mxu0 0.0
  %821 = vmatpush.msra.mxu0 0.0
  %822 = vmatpush.msra.mxu0 0.0
  %823 = vmatpush.msra.mxu0 0.0
  %824 = vmatpush.msra.mxu0 0.0
  %825 = vmatpush.msra.mxu0 0.0
  %826 = vmatpush.msra.mxu0 0.0
  %827 = vmatpush.msra.mxu0 %v102
  %828 = vmatpush.msra.mxu0 %v101
  %829 = vmatpush.msra.mxu0 %v100
  %830 = vmatpush.msra.mxu0 %v99
  %831 = vmatmul.f32.gmra.mxu0 %v813
  %v832 = vpop.f32.mrf.mxu0
  %v833 = vadd.f32 %v110, %v832
  %834 = vdwg.mxu0
  %836 = vrot.lane.b32.xlu0 %v806, 96
  %v837 = vpop.permute.xlu0 %836
  %v838 = vsel %vm112, %v837, 0
  %840 = vmatpush.msra.mxu0 0.0
  %841 = vmatpush.msra.mxu0 0.0
  %842 = vmatpush.msra.mxu0 0.0
  %843 = vmatpush.msra.mxu0 0.0
  %844 = vmatpush.msra.mxu0 0.0
  %845 = vmatpush.msra.mxu0 0.0
  %846 = vmatpush.msra.mxu0 0.0
  %847 = vmatpush.msra.mxu0 0.0
  %848 = vmatpush.msra.mxu0 0.0
  %849 = vmatpush.msra.mxu0 0.0
  %850 = vmatpush.msra.mxu0 0.0
  %851 = vmatpush.msra.mxu0 0.0
  %852 = vmatpush.msra.mxu0 %v106
  %853 = vmatpush.msra.mxu0 %v105
  %854 = vmatpush.msra.mxu0 %v104
  %855 = vmatpush.msra.mxu0 %v103
  %856 = vmatmul.f32.gmra.mxu0 %v838
  %v857 = vpop.f32.mrf.mxu0
  %v858 = vadd.f32 %v137, %v857
  %859 = vdwg.mxu0
  %v861 = vrot.slane %v833, 6
  %v863 = vadd.f32 %v76, %v861
  %v864 = vxor.u32 %v863, 2147483648
  %v865 = vmul.f32 %v864, 1.442695
  %v866 = vpow.pop %v865
  %v867 = vadd.f32 %v866, 1.0
  %v868 = vrcp.pop %v867
  %v869 = vmul.f32 %v867, %v868
  %v870 = vsub.f32 1.0, %v869
  %v871 = vmul.f32 %v868, %v870
  %v872 = vadd.f32 %v868, %v871
  %vm873 = vweird.f32 %v867
  %vm874 = vweird.f32 %v868
  %vm875 = vmor %vm873, %vm874
  %v876 = vsel %vm875, %v868, %v872
  %v877 = vand.u32 2147483647, %v867
  %vm878 = vcmp.eq.f32.partialorder %v877, 8.507059e+37
  %v879 = vand.u32 %v867, 2147483648
  %v880 = vor.u32 1.1754944e-38, %v879
  %v881 = vsel %vm878, %v880, %v876
  %v882 = vmul.f32 1.0, %v881
  %v884 = vrot.slane %v858, 6
  %v886 = vadd.f32 %v98, %v884
  %v887 = vxor.u32 %v886, 2147483648
  %v888 = vmul.f32 %v887, 1.442695
  %v889 = vpow.pop %v888
  %v890 = vadd.f32 %v889, 1.0
  %v891 = vrcp.pop %v890
  %v892 = vmul.f32 %v890, %v891
  %v893 = vsub.f32 1.0, %v892
  %v894 = vmul.f32 %v891, %v893
  %v895 = vadd.f32 %v891, %v894
  %vm896 = vweird.f32 %v890
  %vm897 = vweird.f32 %v891
  %vm898 = vmor %vm896, %vm897
  %v899 = vsel %vm898, %v891, %v895
  %v900 = vand.u32 2147483647, %v890
  %vm901 = vcmp.eq.f32.partialorder %v900, 8.507059e+37
  %v902 = vand.u32 %v890, 2147483648
  %v903 = vor.u32 1.1754944e-38, %v902
  %v904 = vsel %vm901, %v903, %v899
  %v905 = vmul.f32 1.0, %v904
  %906 = vrot.lane.b32.xlu0 %v861, 64
  %v907 = vpop.permute.xlu0 %906
  %v909 = vmul.f32 %v882, %v907
  %911 = vrot.lane.b32.xlu0 %v909, 64
  %v912 = vpop.permute.xlu0 %911
  %v914 = vadd.f32 %v76, %v912
  %v915 = vtanh.pop %v914
  %916 = vrot.lane.b32.xlu0 %v884, 64
  %v917 = vpop.permute.xlu0 %916
  %v919 = vmul.f32 %v905, %v917
  %921 = vrot.lane.b32.xlu0 %v919, 64
  %v922 = vpop.permute.xlu0 %921
  %v924 = vadd.f32 %v98, %v922
  %v925 = vtanh.pop %v924
  %v926 = vsub.f32 1.0, %v882
  %928 = vrot.lane.b32.xlu0 %v915, 96
  %v929 = vpop.permute.xlu0 %928
  %v931 = vmul.f32 %v926, %v929
  %v932 = vrot.slane %v797, 6
  %v934 = vmul.f32 %v882, %v932
  %v935 = vadd.f32 %v931, %v934
  %v936 = vsub.f32 1.0, %v905
  %938 = vrot.lane.b32.xlu0 %v925, 96
  %v939 = vpop.permute.xlu0 %938
  %v941 = vmul.f32 %v936, %v939
  %v942 = vrot.slane %v806, 6
  %v944 = vmul.f32 %v905, %v942
  %v945 = vadd.f32 %v941, %v944
  %947 = vrot.lane.b32.xlu0 %v935, 96
  %v948 = vpop.permute.xlu0 %947
  %950 = vst.msk [vmem:[%s10 + $0x8] sm:$0xc] %vm382, %v948
  %951 = vst.msk [vmem:[%s10 + $0x8] sm:$0xc] %vm384, %v945
  %v952 = vrot.slane %v935, 2
  %953 = vrot.lane.b32.xlu0 %v952, 96
  %v954 = vpop.permute.xlu0 %953
  %v955 = vsel %vm112, %v954, 0
  %957 = vmatpush.msra.mxu0 0.0
  %958 = vmatpush.msra.mxu0 0.0
  %959 = vmatpush.msra.mxu0 0.0
  %960 = vmatpush.msra.mxu0 0.0
  %961 = vmatpush.msra.mxu0 0.0
  %962 = vmatpush.msra.mxu0 0.0
  %963 = vmatpush.msra.mxu0 0.0
  %964 = vmatpush.msra.mxu0 0.0
  %965 = vmatpush.msra.mxu0 0.0
  %966 = vmatpush.msra.mxu0 0.0
  %967 = vmatpush.msra.mxu0 0.0
  %968 = vmatpush.msra.mxu0 0.0
  %969 = vmatpush.msra.mxu0 %v102
  %970 = vmatpush.msra.mxu0 %v101
  %971 = vmatpush.msra.mxu0 %v100
  %972 = vmatpush.msra.mxu0 %v99
  %973 = vmatmul.f32.gmra.mxu0 %v955
  %v974 = vpop.f32.mrf.mxu0
  %v975 = vadd.f32 %v110, %v974
  %976 = vdwg.mxu0
  %v978 = vrot.slane %v945, 2
  %979 = vrot.lane.b32.xlu0 %v978, 96
  %v980 = vpop.permute.xlu0 %979
  %v981 = vsel %vm112, %v980, 0
  %983 = vmatpush.msra.mxu0 0.0
  %984 = vmatpush.msra.mxu0 0.0
  %985 = vmatpush.msra.mxu0 0.0
  %986 = vmatpush.msra.mxu0 0.0
  %987 = vmatpush.msra.mxu0 0.0
  %988 = vmatpush.msra.mxu0 0.0
  %989 = vmatpush.msra.mxu0 0.0
  %990 = vmatpush.msra.mxu0 0.0
  %991 = vmatpush.msra.mxu0 0.0
  %992 = vmatpush.msra.mxu0 0.0
  %993 = vmatpush.msra.mxu0 0.0
  %994 = vmatpush.msra.mxu0 0.0
  %995 = vmatpush.msra.mxu0 %v106
  %996 = vmatpush.msra.mxu0 %v105
  %997 = vmatpush.msra.mxu0 %v104
  %998 = vmatpush.msra.mxu0 %v103
  %999 = vmatmul.f32.gmra.mxu0 %v981
  %v1000 = vpop.f32.mrf.mxu0
  %v1001 = vadd.f32 %v137, %v1000
  %1002 = vdwg.mxu0
  %v1004 = vrot.slane %v975, 4
  %v1006 = vadd.f32 %v76, %v1004
  %v1007 = vxor.u32 %v1006, 2147483648
  %v1008 = vmul.f32 %v1007, 1.442695
  %v1009 = vpow.pop %v1008
  %v1010 = vadd.f32 %v1009, 1.0
  %v1011 = vrcp.pop %v1010
  %v1012 = vmul.f32 %v1010, %v1011
  %v1013 = vsub.f32 1.0, %v1012
  %v1014 = vmul.f32 %v1011, %v1013
  %v1015 = vadd.f32 %v1011, %v1014
  %vm1016 = vweird.f32 %v1010
  %vm1017 = vweird.f32 %v1011
  %vm1018 = vmor %vm1016, %vm1017
  %v1019 = vsel %vm1018, %v1011, %v1015
  %v1020 = vand.u32 2147483647, %v1010
  %vm1021 = vcmp.eq.f32.partialorder %v1020, 8.507059e+37
  %v1022 = vand.u32 %v1010, 2147483648
  %v1023 = vor.u32 1.1754944e-38, %v1022
  %v1024 = vsel %vm1021, %v1023, %v1019
  %v1025 = vmul.f32 1.0, %v1024
  %v1027 = vrot.slane %v1001, 4
  %v1029 = vadd.f32 %v98, %v1027
  %v1030 = vxor.u32 %v1029, 2147483648
  %v1031 = vmul.f32 %v1030, 1.442695
  %v1032 = vpow.pop %v1031
  %v1033 = vadd.f32 %v1032, 1.0
  %v1034 = vrcp.pop %v1033
  %v1035 = vmul.f32 %v1033, %v1034
  %v1036 = vsub.f32 1.0, %v1035
  %v1037 = vmul.f32 %v1034, %v1036
  %v1038 = vadd.f32 %v1034, %v1037
  %vm1039 = vweird.f32 %v1033
  %vm1040 = vweird.f32 %v1034
  %vm1041 = vmor %vm1039, %vm1040
  %v1042 = vsel %vm1041, %v1034, %v1038
  %v1043 = vand.u32 2147483647, %v1033
  %vm1044 = vcmp.eq.f32.partialorder %v1043, 8.507059e+37
  %v1045 = vand.u32 %v1033, 2147483648
  %v1046 = vor.u32 1.1754944e-38, %v1045
  %v1047 = vsel %vm1044, %v1046, %v1042
  %v1048 = vmul.f32 1.0, %v1047
  %1049 = vrot.lane.b32.xlu0 %v1004, 64
  %v1050 = vpop.permute.xlu0 %1049
  %v1052 = vmul.f32 %v1025, %v1050
  %1054 = vrot.lane.b32.xlu0 %v1052, 64
  %v1055 = vpop.permute.xlu0 %1054
  %v1057 = vadd.f32 %v76, %v1055
  %v1058 = vtanh.pop %v1057
  %1059 = vrot.lane.b32.xlu0 %v1027, 64
  %v1060 = vpop.permute.xlu0 %1059
  %v1062 = vmul.f32 %v1048, %v1060
  %1064 = vrot.lane.b32.xlu0 %v1062, 64
  %v1065 = vpop.permute.xlu0 %1064
  %v1067 = vadd.f32 %v98, %v1065
  %v1068 = vtanh.pop %v1067
  %v1069 = vsub.f32 1.0, %v1025
  %1071 = vrot.lane.b32.xlu0 %v1058, 96
  %v1072 = vpop.permute.xlu0 %1071
  %v1074 = vmul.f32 %v1069, %v1072
  %v1075 = vrot.slane %v935, 6
  %v1077 = vmul.f32 %v1025, %v1075
  %v1078 = vadd.f32 %v1074, %v1077
  %v1079 = vsub.f32 1.0, %v1048
  %1081 = vrot.lane.b32.xlu0 %v1068, 96
  %v1082 = vpop.permute.xlu0 %1081
  %v1084 = vmul.f32 %v1079, %v1082
  %v1085 = vrot.slane %v945, 6
  %v1087 = vmul.f32 %v1048, %v1085
  %v1088 = vadd.f32 %v1084, %v1087
  %1090 = vrot.lane.b32.xlu0 %v1078, 96
  %v1091 = vpop.permute.xlu0 %1090
  %1093 = vst.msk [vmem:[%s10 + $0x8] sm:$0x30] %vm527, %v1091
  %1094 = vst.msk [vmem:[%s10 + $0x8] sm:$0x30] %vm529, %v1088
  %v1095 = vrot.slane %v1078, 4
  %1096 = vrot.lane.b32.xlu0 %v1095, 96
  %v1097 = vpop.permute.xlu0 %1096
  %v1098 = vsel %vm112, %v1097, 0
  %1100 = vmatpush.msra.mxu0 0.0
  %1101 = vmatpush.msra.mxu0 0.0
  %1102 = vmatpush.msra.mxu0 0.0
  %1103 = vmatpush.msra.mxu0 0.0
  %1104 = vmatpush.msra.mxu0 0.0
  %1105 = vmatpush.msra.mxu0 0.0
  %1106 = vmatpush.msra.mxu0 0.0
  %1107 = vmatpush.msra.mxu0 0.0
  %1108 = vmatpush.msra.mxu0 0.0
  %1109 = vmatpush.msra.mxu0 0.0
  %1110 = vmatpush.msra.mxu0 0.0
  %1111 = vmatpush.msra.mxu0 0.0
  %1112 = vmatpush.msra.mxu0 %v102
  %1113 = vmatpush.msra.mxu0 %v101
  %1114 = vmatpush.msra.mxu0 %v100
  %1115 = vmatpush.msra.mxu0 %v99
  %1116 = vmatmul.f32.gmra.mxu0 %v1098
  %v1117 = vpop.f32.mrf.mxu0
  %v1118 = vadd.f32 %v110, %v1117
  %1119 = vdwg.mxu0
  %v1121 = vrot.slane %v1088, 4
  %1122 = vrot.lane.b32.xlu0 %v1121, 96
  %v1123 = vpop.permute.xlu0 %1122
  %v1124 = vsel %vm112, %v1123, 0
  %1126 = vmatpush.msra.mxu0 0.0
  %1127 = vmatpush.msra.mxu0 0.0
  %1128 = vmatpush.msra.mxu0 0.0
  %1129 = vmatpush.msra.mxu0 0.0
  %1130 = vmatpush.msra.mxu0 0.0
  %1131 = vmatpush.msra.mxu0 0.0
  %1132 = vmatpush.msra.mxu0 0.0
  %1133 = vmatpush.msra.mxu0 0.0
  %1134 = vmatpush.msra.mxu0 0.0
  %1135 = vmatpush.msra.mxu0 0.0
  %1136 = vmatpush.msra.mxu0 0.0
  %1137 = vmatpush.msra.mxu0 0.0
  %1138 = vmatpush.msra.mxu0 %v106
  %1139 = vmatpush.msra.mxu0 %v105
  %1140 = vmatpush.msra.mxu0 %v104
  %1141 = vmatpush.msra.mxu0 %v103
  %1142 = vmatmul.f32.gmra.mxu0 %v1124
  %v1143 = vpop.f32.mrf.mxu0
  %v1144 = vadd.f32 %v137, %v1143
  %1145 = vdwg.mxu0
  %v1147 = vrot.slane %v1118, 2
  %v1149 = vadd.f32 %v76, %v1147
  %v1150 = vxor.u32 %v1149, 2147483648
  %v1151 = vmul.f32 %v1150, 1.442695
  %v1152 = vpow.pop %v1151
  %v1153 = vadd.f32 %v1152, 1.0
  %v1154 = vrcp.pop %v1153
  %v1155 = vmul.f32 %v1153, %v1154
  %v1156 = vsub.f32 1.0, %v1155
  %v1157 = vmul.f32 %v1154, %v1156
  %v1158 = vadd.f32 %v1154, %v1157
  %vm1159 = vweird.f32 %v1153
  %vm1160 = vweird.f32 %v1154
  %vm1161 = vmor %vm1159, %vm1160
  %v1162 = vsel %vm1161, %v1154, %v1158
  %v1163 = vand.u32 2147483647, %v1153
  %vm1164 = vcmp.eq.f32.partialorder %v1163, 8.507059e+37
  %v1165 = vand.u32 %v1153, 2147483648
  %v1166 = vor.u32 1.1754944e-38, %v1165
  %v1167 = vsel %vm1164, %v1166, %v1162
  %v1168 = vmul.f32 1.0, %v1167
  %v1170 = vrot.slane %v1144, 2
  %v1172 = vadd.f32 %v98, %v1170
  %v1173 = vxor.u32 %v1172, 2147483648
  %v1174 = vmul.f32 %v1173, 1.442695
  %v1175 = vpow.pop %v1174
  %v1176 = vadd.f32 %v1175, 1.0
  %v1177 = vrcp.pop %v1176
  %v1178 = vmul.f32 %v1176, %v1177
  %v1179 = vsub.f32 1.0, %v1178
  %v1180 = vmul.f32 %v1177, %v1179
  %v1181 = vadd.f32 %v1177, %v1180
  %vm1182 = vweird.f32 %v1176
  %vm1183 = vweird.f32 %v1177
  %vm1184 = vmor %vm1182, %vm1183
  %v1185 = vsel %vm1184, %v1177, %v1181
  %v1186 = vand.u32 2147483647, %v1176
  %vm1187 = vcmp.eq.f32.partialorder %v1186, 8.507059e+37
  %v1188 = vand.u32 %v1176, 2147483648
  %v1189 = vor.u32 1.1754944e-38, %v1188
  %v1190 = vsel %vm1187, %v1189, %v1185
  %v1191 = vmul.f32 1.0, %v1190
  %1192 = vrot.lane.b32.xlu0 %v1147, 64
  %v1193 = vpop.permute.xlu0 %1192
  %v1195 = vmul.f32 %v1168, %v1193
  %1197 = vrot.lane.b32.xlu0 %v1195, 64
  %v1198 = vpop.permute.xlu0 %1197
  %v1200 = vadd.f32 %v76, %v1198
  %v1201 = vtanh.pop %v1200
  %1202 = vrot.lane.b32.xlu0 %v1170, 64
  %v1203 = vpop.permute.xlu0 %1202
  %v1205 = vmul.f32 %v1191, %v1203
  %1207 = vrot.lane.b32.xlu0 %v1205, 64
  %v1208 = vpop.permute.xlu0 %1207
  %v1210 = vadd.f32 %v98, %v1208
  %v1211 = vtanh.pop %v1210
  %v1212 = vsub.f32 1.0, %v1168
  %1214 = vrot.lane.b32.xlu0 %v1201, 96
  %v1215 = vpop.permute.xlu0 %1214
  %v1217 = vmul.f32 %v1212, %v1215
  %v1218 = vrot.slane %v1078, 6
  %v1220 = vmul.f32 %v1168, %v1218
  %v1221 = vadd.f32 %v1217, %v1220
  %v1222 = vsub.f32 1.0, %v1191
  %1224 = vrot.lane.b32.xlu0 %v1211, 96
  %v1225 = vpop.permute.xlu0 %1224
  %v1227 = vmul.f32 %v1222, %v1225
  %v1228 = vrot.slane %v1088, 6
  %v1230 = vmul.f32 %v1191, %v1228
  %v1231 = vadd.f32 %v1227, %v1230
  %1233 = vrot.lane.b32.xlu0 %v1221, 96
  %v1234 = vpop.permute.xlu0 %1233
  %1236 = vst.msk [vmem:[%s10 + $0x8] sm:$0xc0] %vm672, %v1234
  %1237 = vst.msk [vmem:[%s10 + $0x8] sm:$0xc0] %vm674, %v1231
  // Predicated region
  $region42: #{forward.2} parent=0 // pred_check
    _
  $region43: #{forward.2} parent=0 // pred_check_branch
    %1239 = sbr.rel (0) target = $region45
  $region44: #{forward.2} parent=0 // pred_region
    _
  $region45: #{forward.2} parent=0 // pred_fallthru
    _
  // Predicated region
  $region46: #{forward.2} parent=0 // pred_check
    _
  $region47: #{forward.2} parent=0 // pred_check_branch
    %1241 = sbr.rel (0) target = $region49
  $region48: #{forward.2} parent=0 // pred_region
    _
  $region49: #{forward.2} parent=0 // pred_fallthru
    _

</llo_original>
